<compile_context>
chip_gen: v7x
topology: tpu7x:2x2x1
jax: 0.10.0
libtpu: 0.0.40
codegen_flags: <defaults>
</compile_context>

<pallas_src>
import jax
import jax.numpy as jnp
from jax.experimental import pallas as pl
from jax.experimental.pallas import tpu as pltpu


_OUT_LANES = 128    # lane-dense output slab width
_BIAS_LANES = 128   # all biases packed into one (1, 128) lane-dense slab


# --------------------------------------------------------------------------
# helpers
# --------------------------------------------------------------------------
def _vmem():
    return pl.BlockSpec(memory_space=pltpu.MemorySpace.VMEM)


def _sigmoid(x):
    # Stable sigmoid: 0.5*(tanh(x/2)+1) — tanh runs on the EUP, no divide,
    # no exp(-x) overflow.
    return 0.5 * (jnp.tanh(0.5 * x) + 1.0)


def _im2col(x_nhwc, k=3):
    # Host-side im2col for 3x3 conv, stride 1, padding 1.
    # NOTE(perf): for production H,W move this inside the kernel (9 shifted
    # slices of the padded NHWC map) to keep HBM->VMEM traffic at 1x.
    # NOTE(correctness): rows are ordered (kk-major, C-minor) to match the
    # stand-in cnn_wconv layout; real PyTorch (O,C,K,K) weights would need a
    # permutation before import.
    B, H, W, C = x_nhwc.shape
    xp = jnp.pad(x_nhwc, ((0, 0), (1, 1), (1, 1), (0, 0)))
    cols = []
    for ki in range(k):
        for kj in range(k):
            cols.append(xp[:, ki:ki + H, kj:kj + W, :])
    patches = jnp.stack(cols, axis=3)                 # (B, H, W, K*K, C)
    return patches.reshape(B * H * W, k * k * C)


# --------------------------------------------------------------------------
# Fused MoE kernel: 3 experts + gating in one pallas_call
# --------------------------------------------------------------------------
def _moe_fused_kernel(patches_ref, xrnn_ref, xmlp_ref,
                      wconv_ref, wih_ref, whh_ref, w1_ref,
                      wheads_ref, gw1_ref, gw2_ref, bias_ref,
                      out_ref):
    f32 = jnp.float32
    B        = xmlp_ref.shape[0]
    conv_out = wconv_ref.shape[1]
    rnn_hid  = whh_ref.shape[0]
    mlp_hid  = w1_ref.shape[1]
    gate_hid = gw1_ref.shape[1]
    n_exp    = gw2_ref.shape[1]
    hw       = patches_ref.shape[0] // B
    T        = xrnn_ref.shape[0] // B

    # Unpack the lane-packed bias slab (static lane slices of a single vreg).
    biases = bias_ref[...]                                    # (1, 128)
    o = 0
    bconv  = biases[:, o:o + conv_out]; o += conv_out
    bh     = biases[:, o:o + rnn_hid];  o += rnn_hid
    b1     = biases[:, o:o + mlp_hid];  o += mlp_hid
    bheads = biases[:, o:o + n_exp];    o += n_exp
    gb1    = biases[:, o:o + gate_hid]; o += gate_hid
    gb2    = biases[:, o:o + n_exp]

    # ---- Formation expert (CNN trunk): conv-as-matmul -> ReLU -> global avg pool
    conv = jnp.dot(patches_ref[...], wconv_ref[...],
                   preferred_element_type=f32) + bconv        # (B*H*W, conv_out)
    conv = jnp.maximum(conv, 0.0)
    pooled = jnp.mean(conv.reshape(B, hw, conv_out), axis=1)  # (B, conv_out) XLU reduce

    # ---- Offensive coordinator (RNN trunk): hoisted input projection + unrolled recurrence
    xh = jnp.dot(xrnn_ref[...], wih_ref[...],
                 preferred_element_type=f32) + bh             # (T*B, rnn_hid)
    h = jnp.zeros((B, rnn_hid), f32)
    for t in range(T):                                        # static unroll (T known at trace time)
        h = jnp.tanh(xh[t * B:(t + 1) * B, :]
                     + jnp.dot(h, whh_ref[...], preferred_element_type=f32))

    # ---- Game context (MLP trunk): FC -> ReLU
    hm = jnp.maximum(jnp.dot(xmlp_ref[...], w1_ref[...],
                             preferred_element_type=f32) + b1, 0.0)   # (B, mlp_hid)

    # ---- Packed expert heads: one block-diagonal FC over all trunks -> sigmoid preds
    trunk = jnp.concatenate([pooled, h, hm], axis=-1)                 # (B, conv_out+rnn_hid+mlp_hid)
    preds = _sigmoid(jnp.dot(trunk, wheads_ref[...],
                             preferred_element_type=f32) + bheads)    # (B, n_exp)

    # ---- Gating network: FC -> ReLU -> FC -> softmax -> weighted mixture
    gh = jnp.maximum(jnp.dot(preds, gw1_ref[...],
                             preferred_element_type=f32) + gb1, 0.0)
    gl = jnp.dot(gh, gw2_ref[...], preferred_element_type=f32) + gb2  # (B, n_exp)
    m = jnp.max(gl, axis=-1, keepdims=True)
    e = jnp.exp(gl - m)
    w = e / jnp.sum(e, axis=-1, keepdims=True)                        # softmax
    final = jnp.sum(w * preds, axis=-1, keepdims=True)                # (B, 1)

    # ---- Single lane-dense output slab: [final | weights | preds | zero-pad]
    pad = jnp.zeros((B, out_ref.shape[1] - (1 + 2 * n_exp)), f32)
    out_ref[...] = jnp.concatenate([final, w, preds, pad], axis=-1)


# --------------------------------------------------------------------------
# MixtureOfExperts forward (host wrapper)
# --------------------------------------------------------------------------
def moe_forward(cnn_features, mlp_features, rnn_features, params):
    B, C, H, W = cnn_features.shape
    _, T, F_rnn = rnn_features.shape

    # Host-side layout prep only (cheap reshapes / im2col); all math is in-kernel.
    x_nhwc = jnp.transpose(cnn_features, (0, 2, 3, 1))
    patches = _im2col(x_nhwc, k=3)                                   # (B*H*W, 9*C)
    xrnn = jnp.transpose(rnn_features, (1, 0, 2)).reshape(T * B, F_rnn)

    conv_out = params["cnn_wconv"].shape[1]
    rnn_hid  = params["rnn_whh"].shape[0]
    mlp_hid  = params["mlp_w1"].shape[1]
    n_exp    = params["gate_w2"].shape[1]

    # Pack the per-expert output heads into one block-diagonal weight so the
    # three tiny FCs run as a single wider MXU matmul producing (B, 3) preds.
    wheads = jnp.zeros((conv_out + rnn_hid + mlp_hid, n_exp), jnp.float32)
    wheads = wheads.at[:conv_out, 0].set(params["cnn_wfc"][:, 0])
    wheads = wheads.at[conv_out:conv_out + rnn_hid, 1].set(params["rnn_wout"][:, 0])
    wheads = wheads.at[conv_out + rnn_hid:, 2].set(params["mlp_w2"][:, 0])

    # Pack every bias into one lane-dense (1, 128) slab (one DMA instead of ten).
    biases = jnp.concatenate(
        [params["cnn_bconv"], params["rnn_bh"], params["mlp_b1"],
         params["cnn_bfc"], params["rnn_bout"], params["mlp_b2"],
         params["gate_b1"], params["gate_b2"]], axis=1)
    assert biases.shape[1] <= _BIAS_LANES
    biases = jnp.pad(biases, ((0, 0), (0, _BIAS_LANES - biases.shape[1])))

    # NOTE: no grid / BlockSpec tiling on purpose — the whole working set is
    # << VMEM on every generation, so a grid only adds per-step overhead.  For
    # production batch sizes, add a grid axis over B with
    # compiler_params=pltpu.CompilerParams(dimension_semantics=("parallel",))
    # to shard work across v7x's two TensorCores.
    slab = pl.pallas_call(
        _moe_fused_kernel,
        out_shape=jax.ShapeDtypeStruct((B, _OUT_LANES), jnp.float32),
        in_specs=[_vmem()] * 11,
        out_specs=_vmem(),
    )(patches, xrnn, mlp_features,
      params["cnn_wconv"], params["rnn_wih"], params["rnn_whh"], params["mlp_w1"],
      wheads, params["gate_w1"], params["gate_w2"], biases)

    final_pred     = slab[:, 0]                                       # (B,)
    expert_weights = slab[:, 1:1 + n_exp]                             # (B, 3)
    formation      = slab[:, 1 + n_exp:2 + n_exp]                     # (B, 1)
    coordinator    = slab[:, 2 + n_exp:3 + n_exp]                     # (B, 1)
    context        = slab[:, 3 + n_exp:4 + n_exp]                     # (B, 1)
    return final_pred, expert_weights, {
        "formation": formation, "coordinator": coordinator, "context": context}


# --------------------------------------------------------------------------
# Pure-JAX reference (for sanity checking the fused kernel)
# --------------------------------------------------------------------------
def moe_reference(cnn_features, mlp_features, rnn_features, p):
    B, C, H, W = cnn_features.shape
    x_nhwc = jnp.transpose(cnn_features, (0, 2, 3, 1))
    patches = _im2col(x_nhwc, k=3)
    conv = jnp.maximum(patches @ p["cnn_wconv"] + p["cnn_bconv"], 0.0)
    pooled = jnp.mean(conv.reshape(B, H * W, -1), axis=1)
    formation = jax.nn.sigmoid(pooled @ p["cnn_wfc"] + p["cnn_bfc"])

    xr = jnp.transpose(rnn_features, (1, 0, 2))                       # (T, B, F)
    h = jnp.zeros((B, p["rnn_whh"].shape[0]), jnp.float32)
    for t in range(xr.shape[0]):
        h = jnp.tanh(xr[t] @ p["rnn_wih"] + h @ p["rnn_whh"] + p["rnn_bh"])
    coordinator = jax.nn.sigmoid(h @ p["rnn_wout"] + p["rnn_bout"])

    hm = jnp.maximum(mlp_features @ p["mlp_w1"] + p["mlp_b1"], 0.0)
    context = jax.nn.sigmoid(hm @ p["mlp_w2"] + p["mlp_b2"])

    preds = jnp.concatenate([formation, coordinator, context], axis=1)
    gh = jnp.maximum(preds @ p["gate_w1"] + p["gate_b1"], 0.0)
    gl = gh @ p["gate_w2"] + p["gate_b2"]
    w = jax.nn.softmax(gl, axis=-1)
    final = jnp.sum(w * preds, axis=-1)
    return final, w, {"formation": formation, "coordinator": coordinator,
                      "context": context}


# --------------------------------------------------------------------------
# Deterministic parameter initialization
# --------------------------------------------------------------------------
def init_params(key, *, c_in=4, conv_out=8, rnn_in=8, rnn_hidden=16,
                mlp_in=16, mlp_hidden=32, gate_hidden=16):
    ks = jax.random.split(key, 12)
    s = 0.1
    f32 = jnp.float32
    return {
        # CNN expert: conv weight laid out (K*K*C_in, O) to match im2col order
        "cnn_wconv": s * jax.random.normal(ks[0], (9 * c_in, conv_out), f32),
        "cnn_bconv": s * jax.random.normal(ks[1], (1, conv_out), f32),
        "cnn_wfc":   s * jax.random.normal(ks[2], (conv_out, 1), f32),
        "cnn_bfc":   s * jax.random.normal(ks[3], (1, 1), f32),
        # RNN expert
        "rnn_wih":   s * jax.random.normal(ks[4], (rnn_in, rnn_hidden), f32),
        "rnn_whh":   s * jax.random.normal(ks[5], (rnn_hidden, rnn_hidden), f32),
        "rnn_bh":    s * jax.random.normal(ks[6], (1, rnn_hidden), f32),
        "rnn_wout":  s * jax.random.normal(ks[7], (rnn_hidden, 1), f32),
        "rnn_bout":  jnp.zeros((1, 1), f32),
        # MLP expert
        "mlp_w1":    s * jax.random.normal(ks[8], (mlp_in, mlp_hidden), f32),
        "mlp_b1":    jnp.zeros((1, mlp_hidden), f32),
        "mlp_w2":    s * jax.random.normal(ks[9], (mlp_hidden, 1), f32),
        "mlp_b2":    jnp.zeros((1, 1), f32),
        # Gating network (input dim = 3 experts)
        "gate_w1":   s * jax.random.normal(ks[10], (3, gate_hidden), f32),
        "gate_b1":   jnp.zeros((1, gate_hidden), f32),
        "gate_w2":   s * jax.random.normal(ks[11], (gate_hidden, 3), f32),
        "gate_b2":   jnp.zeros((1, 3), f32),
    }


# TODO(synk): the `train` method (BCELoss + Adam on the gating network) is a
# training loop, not forward compute, and is intentionally not translated.

if __name__ == "__main__":
    key = jax.random.PRNGKey(0)
    k_in, k_par = jax.random.split(key)
    k0, k1, k2 = jax.random.split(k_in, 3)

    B, C, H, W = 2, 4, 16, 16          # cnn_features after permute(0,3,1,2) -> NCHW
    T, F_rnn = 8, 8
    F_mlp = 16

    cnn_features = jax.random.normal(k0, (B, C, H, W), jnp.float32)
    rnn_features = jax.random.normal(k1, (B, T, F_rnn), jnp.float32)
    mlp_features = jax.random.normal(k2, (B, F_mlp), jnp.float32)

    params = init_params(k_par, c_in=C, rnn_in=F_rnn, mlp_in=F_mlp)

    fwd = jax.jit(moe_forward)
    final_pred, expert_weights, expert_preds = fwd(
        cnn_features, mlp_features, rnn_features, params)
    jax.block_until_ready((final_pred, expert_weights, expert_preds))

    # shape checks (match the PyTorch module's outputs)
    assert final_pred.shape == (B,)
    assert expert_weights.shape == (B, 3)
    assert expert_preds["formation"].shape == (B, 1)
    assert expert_preds["coordinator"].shape == (B, 1)
    assert expert_preds["context"].shape == (B, 1)

    # numeric sanity vs pure-JAX reference (loose tol: MXU/XLA f32 precision)
    ref_final, ref_w, ref_preds = moe_reference(
        cnn_features, mlp_features, rnn_features, params)
    assert jnp.max(jnp.abs(final_pred - ref_final)) < 2e-2
    assert jnp.max(jnp.abs(expert_weights - ref_w)) < 2e-2
    assert jnp.max(jnp.abs(expert_preds["formation"] - ref_preds["formation"])) < 2e-2
    assert jnp.max(jnp.abs(expert_preds["coordinator"] - ref_preds["coordinator"])) < 2e-2
    assert jnp.max(jnp.abs(expert_preds["context"] - ref_preds["context"])) < 2e-2
    assert jnp.max(jnp.abs(jnp.sum(expert_weights, axis=-1) - 1.0)) < 1e-3

    print("KERNEL_OK")
</pallas_src>

<mosaic_0001>
module attributes {stable_mosaic.version = 11 : i64} {
  func.func @_moe_fused_kernel(%arg0: memref<512x36xf32, #tpu.memory_space<vmem>>, %arg1: memref<16x8xf32, #tpu.memory_space<vmem>>, %arg2: memref<2x16xf32, #tpu.memory_space<vmem>>, %arg3: memref<36x8xf32, #tpu.memory_space<vmem>>, %arg4: memref<8x16xf32, #tpu.memory_space<vmem>>, %arg5: memref<16x16xf32, #tpu.memory_space<vmem>>, %arg6: memref<16x32xf32, #tpu.memory_space<vmem>>, %arg7: memref<56x3xf32, #tpu.memory_space<vmem>>, %arg8: memref<3x16xf32, #tpu.memory_space<vmem>>, %arg9: memref<16x3xf32, #tpu.memory_space<vmem>>, %arg10: memref<1x128xf32, #tpu.memory_space<vmem>>, %arg11: memref<2x128xf32, #tpu.memory_space<vmem>>) attributes {dimension_semantics = [], scalar_prefetch = 0 : i64, scratch_operands = 0 : i64, tpu.core_type = #tpu.core_type<tc>} {
    %c0 = arith.constant 0 : index
    %c0_0 = arith.constant 0 : index
    %0 = vector.load %arg10[%c0, %c0_0] : memref<1x128xf32, #tpu.memory_space<vmem>>, vector<1x128xf32>
    %1 = vector.extract_strided_slice %0 {offsets = [0, 0], sizes = [1, 8], strides = [1, 1]} : vector<1x128xf32> to vector<1x8xf32>
    %2 = vector.extract_strided_slice %0 {offsets = [0, 8], sizes = [1, 16], strides = [1, 1]} : vector<1x128xf32> to vector<1x16xf32>
    %3 = vector.extract_strided_slice %0 {offsets = [0, 24], sizes = [1, 32], strides = [1, 1]} : vector<1x128xf32> to vector<1x32xf32>
    %4 = vector.extract_strided_slice %0 {offsets = [0, 56], sizes = [1, 3], strides = [1, 1]} : vector<1x128xf32> to vector<1x3xf32>
    %5 = vector.extract_strided_slice %0 {offsets = [0, 59], sizes = [1, 16], strides = [1, 1]} : vector<1x128xf32> to vector<1x16xf32>
    %6 = vector.extract_strided_slice %0 {offsets = [0, 75], sizes = [1, 3], strides = [1, 1]} : vector<1x128xf32> to vector<1x3xf32>
    %c0_1 = arith.constant 0 : index
    %c0_2 = arith.constant 0 : index
    %7 = vector.load %arg0[%c0_1, %c0_2] : memref<512x36xf32, #tpu.memory_space<vmem>>, vector<512x36xf32>
    %c0_3 = arith.constant 0 : index
    %c0_4 = arith.constant 0 : index
    %8 = vector.load %arg3[%c0_3, %c0_4] : memref<36x8xf32, #tpu.memory_space<vmem>>, vector<36x8xf32>
    %cst = arith.constant dense<0.000000e+00> : vector<512x8xf32>
    %9 = tpu.matmul %7, %8, %cst {dimension_numbers = #tpu.dot_dimension_numbers<[1], [0], [0], [1], [0, 0, 1, 1], [], []>} : vector<512x36xf32>, vector<36x8xf32>, vector<512x8xf32> -> vector<512x8xf32>
    %10 = vector.broadcast %1 : vector<1x8xf32> to vector<512x8xf32>
    %11 = arith.addf %9, %10 : vector<512x8xf32>
    %cst_5 = arith.constant 0.000000e+00 : f32
    %12 = vector.broadcast %cst_5 : f32 to vector<512x8xf32>
    %13 = arith.maximumf %11, %12 : vector<512x8xf32>
    %14 = vector.shape_cast %13 : vector<512x8xf32> to vector<2x256x8xf32>
    %cst_6 = arith.constant dense<0.000000e+00> : vector<2x8xf32>
    %15 = vector.multi_reduction <add>, %14, %cst_6 [1] : vector<2x256x8xf32> to vector<2x8xf32>
    %cst_7 = arith.constant 2.560000e+02 : f32
    %16 = vector.broadcast %cst_7 : f32 to vector<2x8xf32>
    %17 = arith.divf %15, %16 : vector<2x8xf32>
    %c0_8 = arith.constant 0 : index
    %c0_9 = arith.constant 0 : index
    %18 = vector.load %arg1[%c0_8, %c0_9] : memref<16x8xf32, #tpu.memory_space<vmem>>, vector<16x8xf32>
    %c0_10 = arith.constant 0 : index
    %c0_11 = arith.constant 0 : index
    %19 = vector.load %arg4[%c0_10, %c0_11] : memref<8x16xf32, #tpu.memory_space<vmem>>, vector<8x16xf32>
    %cst_12 = arith.constant dense<0.000000e+00> : vector<16x16xf32>
    %20 = tpu.matmul %18, %19, %cst_12 {dimension_numbers = #tpu.dot_dimension_numbers<[1], [0], [0], [1], [0, 0, 1, 1], [], []>} : vector<16x8xf32>, vector<8x16xf32>, vector<16x16xf32> -> vector<16x16xf32>
    %21 = vector.broadcast %2 : vector<1x16xf32> to vector<16x16xf32>
    %22 = arith.addf %20, %21 : vector<16x16xf32>
    %cst_13 = arith.constant 0.000000e+00 : f32
    %23 = vector.broadcast %cst_13 : f32 to vector<2x16xf32>
    %24 = vector.extract_strided_slice %22 {offsets = [0, 0], sizes = [2, 16], strides = [1, 1]} : vector<16x16xf32> to vector<2x16xf32>
    %c0_14 = arith.constant 0 : index
    %c0_15 = arith.constant 0 : index
    %25 = vector.load %arg5[%c0_14, %c0_15] : memref<16x16xf32, #tpu.memory_space<vmem>>, vector<16x16xf32>
    %cst_16 = arith.constant dense<0.000000e+00> : vector<2x16xf32>
    %26 = tpu.matmul %23, %25, %cst_16 {dimension_numbers = #tpu.dot_dimension_numbers<[1], [0], [0], [1], [0, 0, 1, 1], [], []>} : vector<2x16xf32>, vector<16x16xf32>, vector<2x16xf32> -> vector<2x16xf32>
    %27 = arith.addf %24, %26 : vector<2x16xf32>
    %28 = math.tanh %27 : vector<2x16xf32>
    %29 = vector.extract_strided_slice %22 {offsets = [2, 0], sizes = [2, 16], strides = [1, 1]} : vector<16x16xf32> to vector<2x16xf32>
    %c0_17 = arith.constant 0 : index
    %c0_18 = arith.constant 0 : index
    %30 = vector.load %arg5[%c0_17, %c0_18] : memref<16x16xf32, #tpu.memory_space<vmem>>, vector<16x16xf32>
    %cst_19 = arith.constant dense<0.000000e+00> : vector<2x16xf32>
    %31 = tpu.matmul %28, %30, %cst_19 {dimension_numbers = #tpu.dot_dimension_numbers<[1], [0], [0], [1], [0, 0, 1, 1], [], []>} : vector<2x16xf32>, vector<16x16xf32>, vector<2x16xf32> -> vector<2x16xf32>
    %32 = arith.addf %29, %31 : vector<2x16xf32>
    %33 = math.tanh %32 : vector<2x16xf32>
    %34 = vector.extract_strided_slice %22 {offsets = [4, 0], sizes = [2, 16], strides = [1, 1]} : vector<16x16xf32> to vector<2x16xf32>
    %c0_20 = arith.constant 0 : index
    %c0_21 = arith.constant 0 : index
    %35 = vector.load %arg5[%c0_20, %c0_21] : memref<16x16xf32, #tpu.memory_space<vmem>>, vector<16x16xf32>
    %cst_22 = arith.constant dense<0.000000e+00> : vector<2x16xf32>
    %36 = tpu.matmul %33, %35, %cst_22 {dimension_numbers = #tpu.dot_dimension_numbers<[1], [0], [0], [1], [0, 0, 1, 1], [], []>} : vector<2x16xf32>, vector<16x16xf32>, vector<2x16xf32> -> vector<2x16xf32>
    %37 = arith.addf %34, %36 : vector<2x16xf32>
    %38 = math.tanh %37 : vector<2x16xf32>
    %39 = vector.extract_strided_slice %22 {offsets = [6, 0], sizes = [2, 16], strides = [1, 1]} : vector<16x16xf32> to vector<2x16xf32>
    %c0_23 = arith.constant 0 : index
    %c0_24 = arith.constant 0 : index
    %40 = vector.load %arg5[%c0_23, %c0_24] : memref<16x16xf32, #tpu.memory_space<vmem>>, vector<16x16xf32>
    %cst_25 = arith.constant dense<0.000000e+00> : vector<2x16xf32>
    %41 = tpu.matmul %38, %40, %cst_25 {dimension_numbers = #tpu.dot_dimension_numbers<[1], [0], [0], [1], [0, 0, 1, 1], [], []>} : vector<2x16xf32>, vector<16x16xf32>, vector<2x16xf32> -> vector<2x16xf32>
    %42 = arith.addf %39, %41 : vector<2x16xf32>
    %43 = math.tanh %42 : vector<2x16xf32>
    %44 = vector.extract_strided_slice %22 {offsets = [8, 0], sizes = [2, 16], strides = [1, 1]} : vector<16x16xf32> to vector<2x16xf32>
    %c0_26 = arith.constant 0 : index
    %c0_27 = arith.constant 0 : index
    %45 = vector.load %arg5[%c0_26, %c0_27] : memref<16x16xf32, #tpu.memory_space<vmem>>, vector<16x16xf32>
    %cst_28 = arith.constant dense<0.000000e+00> : vector<2x16xf32>
    %46 = tpu.matmul %43, %45, %cst_28 {dimension_numbers = #tpu.dot_dimension_numbers<[1], [0], [0], [1], [0, 0, 1, 1], [], []>} : vector<2x16xf32>, vector<16x16xf32>, vector<2x16xf32> -> vector<2x16xf32>
    %47 = arith.addf %44, %46 : vector<2x16xf32>
    %48 = math.tanh %47 : vector<2x16xf32>
    %49 = vector.extract_strided_slice %22 {offsets = [10, 0], sizes = [2, 16], strides = [1, 1]} : vector<16x16xf32> to vector<2x16xf32>
    %c0_29 = arith.constant 0 : index
    %c0_30 = arith.constant 0 : index
    %50 = vector.load %arg5[%c0_29, %c0_30] : memref<16x16xf32, #tpu.memory_space<vmem>>, vector<16x16xf32>
    %cst_31 = arith.constant dense<0.000000e+00> : vector<2x16xf32>
    %51 = tpu.matmul %48, %50, %cst_31 {dimension_numbers = #tpu.dot_dimension_numbers<[1], [0], [0], [1], [0, 0, 1, 1], [], []>} : vector<2x16xf32>, vector<16x16xf32>, vector<2x16xf32> -> vector<2x16xf32>
    %52 = arith.addf %49, %51 : vector<2x16xf32>
    %53 = math.tanh %52 : vector<2x16xf32>
    %54 = vector.extract_strided_slice %22 {offsets = [12, 0], sizes = [2, 16], strides = [1, 1]} : vector<16x16xf32> to vector<2x16xf32>
    %c0_32 = arith.constant 0 : index
    %c0_33 = arith.constant 0 : index
    %55 = vector.load %arg5[%c0_32, %c0_33] : memref<16x16xf32, #tpu.memory_space<vmem>>, vector<16x16xf32>
    %cst_34 = arith.constant dense<0.000000e+00> : vector<2x16xf32>
    %56 = tpu.matmul %53, %55, %cst_34 {dimension_numbers = #tpu.dot_dimension_numbers<[1], [0], [0], [1], [0, 0, 1, 1], [], []>} : vector<2x16xf32>, vector<16x16xf32>, vector<2x16xf32> -> vector<2x16xf32>
    %57 = arith.addf %54, %56 : vector<2x16xf32>
    %58 = math.tanh %57 : vector<2x16xf32>
    %59 = vector.extract_strided_slice %22 {offsets = [14, 0], sizes = [2, 16], strides = [1, 1]} : vector<16x16xf32> to vector<2x16xf32>
    %c0_35 = arith.constant 0 : index
    %c0_36 = arith.constant 0 : index
    %60 = vector.load %arg5[%c0_35, %c0_36] : memref<16x16xf32, #tpu.memory_space<vmem>>, vector<16x16xf32>
    %cst_37 = arith.constant dense<0.000000e+00> : vector<2x16xf32>
    %61 = tpu.matmul %58, %60, %cst_37 {dimension_numbers = #tpu.dot_dimension_numbers<[1], [0], [0], [1], [0, 0, 1, 1], [], []>} : vector<2x16xf32>, vector<16x16xf32>, vector<2x16xf32> -> vector<2x16xf32>
    %62 = arith.addf %59, %61 : vector<2x16xf32>
    %63 = math.tanh %62 : vector<2x16xf32>
    %c0_38 = arith.constant 0 : index
    %c0_39 = arith.constant 0 : index
    %64 = vector.load %arg2[%c0_38, %c0_39] : memref<2x16xf32, #tpu.memory_space<vmem>>, vector<2x16xf32>
    %c0_40 = arith.constant 0 : index
    %c0_41 = arith.constant 0 : index
    %65 = vector.load %arg6[%c0_40, %c0_41] : memref<16x32xf32, #tpu.memory_space<vmem>>, vector<16x32xf32>
    %cst_42 = arith.constant dense<0.000000e+00> : vector<2x32xf32>
    %66 = tpu.matmul %64, %65, %cst_42 {dimension_numbers = #tpu.dot_dimension_numbers<[1], [0], [0], [1], [0, 0, 1, 1], [], []>} : vector<2x16xf32>, vector<16x32xf32>, vector<2x32xf32> -> vector<2x32xf32>
    %67 = vector.broadcast %3 : vector<1x32xf32> to vector<2x32xf32>
    %68 = arith.addf %66, %67 : vector<2x32xf32>
    %cst_43 = arith.constant 0.000000e+00 : f32
    %69 = vector.broadcast %cst_43 : f32 to vector<2x32xf32>
    %70 = arith.maximumf %68, %69 : vector<2x32xf32>
    %71 = tpu.concatenate %17, %63, %70 in 1 : vector<2x8xf32>, vector<2x16xf32>, vector<2x32xf32> -> vector<2x56xf32>
    %c0_44 = arith.constant 0 : index
    %c0_45 = arith.constant 0 : index
    %72 = vector.load %arg7[%c0_44, %c0_45] : memref<56x3xf32, #tpu.memory_space<vmem>>, vector<56x3xf32>
    %cst_46 = arith.constant dense<0.000000e+00> : vector<2x3xf32>
    %73 = tpu.matmul %71, %72, %cst_46 {dimension_numbers = #tpu.dot_dimension_numbers<[1], [0], [0], [1], [0, 0, 1, 1], [], []>} : vector<2x56xf32>, vector<56x3xf32>, vector<2x3xf32> -> vector<2x3xf32>
    %74 = vector.broadcast %4 : vector<1x3xf32> to vector<2x3xf32>
    %75 = arith.addf %73, %74 : vector<2x3xf32>
    %cst_47 = arith.constant 5.000000e-01 : f32
    %76 = vector.broadcast %cst_47 : f32 to vector<2x3xf32>
    %77 = arith.mulf %76, %75 : vector<2x3xf32>
    %78 = math.tanh %77 : vector<2x3xf32>
    %cst_48 = arith.constant 1.000000e+00 : f32
    %79 = vector.broadcast %cst_48 : f32 to vector<2x3xf32>
    %80 = arith.addf %78, %79 : vector<2x3xf32>
    %cst_49 = arith.constant 5.000000e-01 : f32
    %81 = vector.broadcast %cst_49 : f32 to vector<2x3xf32>
    %82 = arith.mulf %81, %80 : vector<2x3xf32>
    %c0_50 = arith.constant 0 : index
    %c0_51 = arith.constant 0 : index
    %83 = vector.load %arg8[%c0_50, %c0_51] : memref<3x16xf32, #tpu.memory_space<vmem>>, vector<3x16xf32>
    %cst_52 = arith.constant dense<0.000000e+00> : vector<2x16xf32>
    %84 = tpu.matmul %82, %83, %cst_52 {dimension_numbers = #tpu.dot_dimension_numbers<[1], [0], [0], [1], [0, 0, 1, 1], [], []>} : vector<2x3xf32>, vector<3x16xf32>, vector<2x16xf32> -> vector<2x16xf32>
    %85 = vector.broadcast %5 : vector<1x16xf32> to vector<2x16xf32>
    %86 = arith.addf %84, %85 : vector<2x16xf32>
    %cst_53 = arith.constant 0.000000e+00 : f32
    %87 = vector.broadcast %cst_53 : f32 to vector<2x16xf32>
    %88 = arith.maximumf %86, %87 : vector<2x16xf32>
    %c0_54 = arith.constant 0 : index
    %c0_55 = arith.constant 0 : index
    %89 = vector.load %arg9[%c0_54, %c0_55] : memref<16x3xf32, #tpu.memory_space<vmem>>, vector<16x3xf32>
    %cst_56 = arith.constant dense<0.000000e+00> : vector<2x3xf32>
    %90 = tpu.matmul %88, %89, %cst_56 {dimension_numbers = #tpu.dot_dimension_numbers<[1], [0], [0], [1], [0, 0, 1, 1], [], []>} : vector<2x16xf32>, vector<16x3xf32>, vector<2x3xf32> -> vector<2x3xf32>
    %91 = vector.broadcast %6 : vector<1x3xf32> to vector<2x3xf32>
    %92 = arith.addf %90, %91 : vector<2x3xf32>
    %cst_57 = arith.constant dense<0xFF800000> : vector<2xf32>
    %93 = vector.multi_reduction <maximumf>, %92, %cst_57 [1] : vector<2x3xf32> to vector<2xf32>
    %94 = vector.shape_cast %93 : vector<2xf32> to vector<2x1xf32>
    %95 = vector.broadcast %94 : vector<2x1xf32> to vector<2x3xf32>
    %96 = arith.subf %92, %95 : vector<2x3xf32>
    %97 = math.exp %96 : vector<2x3xf32>
    %cst_58 = arith.constant dense<0.000000e+00> : vector<2xf32>
    %98 = vector.multi_reduction <add>, %97, %cst_58 [1] : vector<2x3xf32> to vector<2xf32>
    %99 = vector.shape_cast %98 : vector<2xf32> to vector<2x1xf32>
    %100 = vector.broadcast %99 : vector<2x1xf32> to vector<2x3xf32>
    %101 = arith.divf %97, %100 : vector<2x3xf32>
    %102 = arith.mulf %101, %82 : vector<2x3xf32>
    %cst_59 = arith.constant dense<0.000000e+00> : vector<2xf32>
    %103 = vector.multi_reduction <add>, %102, %cst_59 [1] : vector<2x3xf32> to vector<2xf32>
    %104 = vector.shape_cast %103 : vector<2xf32> to vector<2x1xf32>
    %cst_60 = arith.constant 0.000000e+00 : f32
    %105 = vector.broadcast %cst_60 : f32 to vector<2x121xf32>
    %106 = tpu.concatenate %104, %101, %82, %105 in 1 : vector<2x1xf32>, vector<2x3xf32>, vector<2x3xf32>, vector<2x121xf32> -> vector<2x128xf32>
    %c0_61 = arith.constant 0 : index
    %c0_62 = arith.constant 0 : index
    %107 = vector.load %arg11[%c0_61, %c0_62] : memref<2x128xf32, #tpu.memory_space<vmem>>, vector<2x128xf32>
    tpu.vector_store %arg11[%c0_61, %c0_62], %106 {strides = array<i32>} : memref<2x128xf32, #tpu.memory_space<vmem>>, vector<2x128xf32>,
    return
  }
}

</mosaic_0001>

<llo_original>
// kernel: moe_forward.1
$region0: #{moe_forward.1}
  #allocation0 [shape = 'u32[]', space=smem, size = 0x4, offset = 0x4, fixed_abs, tag = 'smem constant byte address 0x4 - core index']
  #allocation1 [shape = 'u32[144,128]{1,0:T(1,128)}', space=vmem, size = 0x12000, scoped, tag = 'internal scratch']
  %s0 = inlined_call_operand.vmem [shape: f32[512,36], index: 0, kind: input, shape index: {}]
  %s1 = inlined_call_operand.vmem [shape: f32[16,8], index: 1, kind: input, shape index: {}]
  %s2 = inlined_call_operand.vmem [shape: f32[2,16], index: 2, kind: input, shape index: {}]
  %s3 = inlined_call_operand.vmem [shape: f32[36,8], index: 3, kind: input, shape index: {}]
  %s4 = inlined_call_operand.vmem [shape: f32[8,16], index: 4, kind: input, shape index: {}]
  %s5 = inlined_call_operand.vmem [shape: f32[16,16], index: 5, kind: input, shape index: {}]
  %s6 = inlined_call_operand.vmem [shape: f32[16,32], index: 6, kind: input, shape index: {}]
  %s7 = inlined_call_operand.vmem [shape: f32[56,3], index: 7, kind: input, shape index: {}]
  %s8 = inlined_call_operand.vmem [shape: f32[3,16], index: 8, kind: input, shape index: {}]
  %s9 = inlined_call_operand.vmem [shape: f32[16,3], index: 9, kind: input, shape index: {}]
  %s10 = inlined_call_operand.vmem [shape: f32[1,128], index: 10, kind: input, shape index: {}]
  %s11 = inlined_call_operand.vmem [shape: f32[2,128], index: 11, kind: output, shape index: {}]
  %s12 = sld [smem:[#allocation0]]
  $region54: #{moe_forward.1} parent=0
    _
  %s14 = ssub.s32 1, %s12
  %s15 = scalar_select 0, %s14, %s12
  // Predicated region
  $region2: #{moe_forward.1} parent=0 // pred_check
    _
  $region3: #{moe_forward.1} parent=0 // pred_check_branch
    %17 = sbr.rel (0) target = $region5
  $region4: #{moe_forward.1} parent=0 // pred_region
    _
  $region5: #{moe_forward.1} parent=0 // pred_fallthru
    _
  // Predicated region
  $region6: #{moe_forward.1} parent=0 // pred_check
    _
  $region7: #{moe_forward.1} parent=0 // pred_check_branch
    %19 = sbr.rel (0) target = $region9
  $region8: #{moe_forward.1} parent=0 // pred_region
    _
  $region9: #{moe_forward.1} parent=0 // pred_fallthru
    _
  // Predicated region
  $region10: #{moe_forward.1} parent=0 // pred_check
    _
  $region11: #{moe_forward.1} parent=0 // pred_check_branch
    %21 = sbr.rel (0) target = $region13
  $region12: #{moe_forward.1} parent=0 // pred_region
    _
  $region13: #{moe_forward.1} parent=0 // pred_fallthru
    _
  // Predicated region
  $region14: #{moe_forward.1} parent=0 // pred_check
    _
  $region15: #{moe_forward.1} parent=0 // pred_check_branch
    %23 = sbr.rel (0) target = $region17
  $region16: #{moe_forward.1} parent=0 // pred_region
    _
  $region17: #{moe_forward.1} parent=0 // pred_fallthru
    _
  // Predicated region
  $region18: #{moe_forward.1} parent=0 // pred_check
    _
  $region19: #{moe_forward.1} parent=0 // pred_check_branch
    %25 = sbr.rel (0) target = $region21
  $region20: #{moe_forward.1} parent=0 // pred_region
    _
  $region21: #{moe_forward.1} parent=0 // pred_fallthru
    _
  // Predicated region
  $region22: #{moe_forward.1} parent=0 // pred_check
    _
  $region23: #{moe_forward.1} parent=0 // pred_check_branch
    %27 = sbr.rel (0) target = $region25
  $region24: #{moe_forward.1} parent=0 // pred_region
    _
  $region25: #{moe_forward.1} parent=0 // pred_fallthru
    _
  // Predicated region
  $region26: #{moe_forward.1} parent=0 // pred_check
    _
  $region27: #{moe_forward.1} parent=0 // pred_check_branch
    %29 = sbr.rel (0) target = $region29
  $region28: #{moe_forward.1} parent=0 // pred_region
    _
  $region29: #{moe_forward.1} parent=0 // pred_fallthru
    _
  // Predicated region
  $region30: #{moe_forward.1} parent=0 // pred_check
    _
  $region31: #{moe_forward.1} parent=0 // pred_check_branch
    %31 = sbr.rel (0) target = $region33
  $region32: #{moe_forward.1} parent=0 // pred_region
    _
  $region33: #{moe_forward.1} parent=0 // pred_fallthru
    _
  // Predicated region
  $region34: #{moe_forward.1} parent=0 // pred_check
    _
  $region35: #{moe_forward.1} parent=0 // pred_check_branch
    %33 = sbr.rel (0) target = $region37
  $region36: #{moe_forward.1} parent=0 // pred_region
    _
  $region37: #{moe_forward.1} parent=0 // pred_fallthru
    _
  // Predicated region
  $region38: #{moe_forward.1} parent=0 // pred_check
    _
  $region39: #{moe_forward.1} parent=0 // pred_check_branch
    %35 = sbr.rel (0) target = $region41
  $region40: #{moe_forward.1} parent=0 // pred_region
    _
  $region41: #{moe_forward.1} parent=0 // pred_fallthru
    _
  // Predicated region
  $region42: #{moe_forward.1} parent=0 // pred_check
    _
  $region43: #{moe_forward.1} parent=0 // pred_check_branch
    %37 = sbr.rel (0) target = $region45
  $region44: #{moe_forward.1} parent=0 // pred_region
    _
  $region45: #{moe_forward.1} parent=0 // pred_fallthru
    _
  %v38 = vld [vmem:[%s10] sm:$0x1]
  %v39 = vld [vmem:[%s0] sm:$0xff]
  %v40 = vld [vmem:[%s0 + $0x8] sm:$0xff]
  %v41 = vld [vmem:[%s0 + $0x10] sm:$0xff]
  %v42 = vld [vmem:[%s0 + $0x18] sm:$0xff]
  %v43 = vld [vmem:[%s0 + $0x20] sm:$0xff]
  %v44 = vld [vmem:[%s0 + $0x28] sm:$0xff]
  %v45 = vld [vmem:[%s0 + $0x30] sm:$0xff]
  %v46 = vld [vmem:[%s0 + $0x38] sm:$0xff]
  %v47 = vld [vmem:[%s0 + $0x40] sm:$0xff]
  %v48 = vld [vmem:[%s0 + $0x48] sm:$0xff]
  %v49 = vld [vmem:[%s0 + $0x50] sm:$0xff]
  %v50 = vld [vmem:[%s0 + $0x58] sm:$0xff]
  %v51 = vld [vmem:[%s0 + $0x60] sm:$0xff]
  %v52 = vld [vmem:[%s0 + $0x68] sm:$0xff]
  %v53 = vld [vmem:[%s0 + $0x70] sm:$0xff]
  %v54 = vld [vmem:[%s0 + $0x78] sm:$0xff]
  %v55 = vld [vmem:[%s0 + $0x80] sm:$0xff]
  %v56 = vld [vmem:[%s0 + $0x88] sm:$0xff]
  %v57 = vld [vmem:[%s0 + $0x90] sm:$0xff]
  %v58 = vld [vmem:[%s0 + $0x98] sm:$0xff]
  %v59 = vld [vmem:[%s0 + $0xa0] sm:$0xff]
  %v60 = vld [vmem:[%s0 + $0xa8] sm:$0xff]
  %v61 = vld [vmem:[%s0 + $0xb0] sm:$0xff]
  %v62 = vld [vmem:[%s0 + $0xb8] sm:$0xff]
  %v63 = vld [vmem:[%s0 + $0xc0] sm:$0xff]
  %v64 = vld [vmem:[%s0 + $0xc8] sm:$0xff]
  %v65 = vld [vmem:[%s0 + $0xd0] sm:$0xff]
  %v66 = vld [vmem:[%s0 + $0xd8] sm:$0xff]
  %v67 = vld [vmem:[%s0 + $0xe0] sm:$0xff]
  %v68 = vld [vmem:[%s0 + $0xe8] sm:$0xff]
  %v69 = vld [vmem:[%s0 + $0xf0] sm:$0xff]
  %v70 = vld [vmem:[%s0 + $0xf8] sm:$0xff]
  %v71 = vld [vmem:[%s0 + $0x100] sm:$0xff]
  %v72 = vld [vmem:[%s0 + $0x108] sm:$0xff]
  %v73 = vld [vmem:[%s0 + $0x110] sm:$0xff]
  %v74 = vld [vmem:[%s0 + $0x118] sm:$0xff]
  %v75 = vld [vmem:[%s0 + $0x120] sm:$0xff]
  %v76 = vld [vmem:[%s0 + $0x128] sm:$0xff]
  %v77 = vld [vmem:[%s0 + $0x130] sm:$0xff]
  %v78 = vld [vmem:[%s0 + $0x138] sm:$0xff]
  %v79 = vld [vmem:[%s0 + $0x140] sm:$0xff]
  %v80 = vld [vmem:[%s0 + $0x148] sm:$0xff]
  %v81 = vld [vmem:[%s0 + $0x150] sm:$0xff]
  %v82 = vld [vmem:[%s0 + $0x158] sm:$0xff]
  %v83 = vld [vmem:[%s0 + $0x160] sm:$0xff]
  %v84 = vld [vmem:[%s0 + $0x168] sm:$0xff]
  %v85 = vld [vmem:[%s0 + $0x170] sm:$0xff]
  %v86 = vld [vmem:[%s0 + $0x178] sm:$0xff]
  %v87 = vld [vmem:[%s0 + $0x180] sm:$0xff]
  %v88 = vld [vmem:[%s0 + $0x188] sm:$0xff]
  %v89 = vld [vmem:[%s0 + $0x190] sm:$0xff]
  %v90 = vld [vmem:[%s0 + $0x198] sm:$0xff]
  %v91 = vld [vmem:[%s0 + $0x1a0] sm:$0xff]
  %v92 = vld [vmem:[%s0 + $0x1a8] sm:$0xff]
  %v93 = vld [vmem:[%s0 + $0x1b0] sm:$0xff]
  %v94 = vld [vmem:[%s0 + $0x1b8] sm:$0xff]
  %v95 = vld [vmem:[%s0 + $0x1c0] sm:$0xff]
  %v96 = vld [vmem:[%s0 + $0x1c8] sm:$0xff]
  %v97 = vld [vmem:[%s0 + $0x1d0] sm:$0xff]
  %v98 = vld [vmem:[%s0 + $0x1d8] sm:$0xff]
  %v99 = vld [vmem:[%s0 + $0x1e0] sm:$0xff]
  %v100 = vld [vmem:[%s0 + $0x1e8] sm:$0xff]
  %v101 = vld [vmem:[%s0 + $0x1f0] sm:$0xff]
  %v102 = vld [vmem:[%s0 + $0x1f8] sm:$0xff]
  %v103 = vld [vmem:[%s3] sm:$0xff]
  %v104 = vld [vmem:[%s3 + $0x8] sm:$0xff]
  %v105 = vld [vmem:[%s3 + $0x10] sm:$0xff]
  %v106 = vld [vmem:[%s3 + $0x18] sm:$0xff]
  %v107 = vld [vmem:[%s3 + $0x20] sm:$0xf]
  %v109 = vlaneseq
  %v110 = vshrl.u32 %v109, 7
  %v111 = vsub.s32 0, %v110
  %v112 = vrot.slane %v38, %v111
  %vm114 = vcmask 293888
  %v116 = vsel %vm114, %v39, 0
  %v119 = vsel %vm114, %v40, 0
  %v122 = vsel %vm114, %v41, 0
  %v125 = vsel %vm114, %v42, 0
  %v128 = vsel %vm114, %v43, 0
  %v131 = vsel %vm114, %v44, 0
  %v134 = vsel %vm114, %v45, 0
  %v137 = vsel %vm114, %v46, 0
  %v140 = vsel %vm114, %v47, 0
  %v143 = vsel %vm114, %v48, 0
  %v146 = vsel %vm114, %v49, 0
  %v149 = vsel %vm114, %v50, 0
  %v152 = vsel %vm114, %v51, 0
  %v155 = vsel %vm114, %v52, 0
  %v158 = vsel %vm114, %v53, 0
  %v161 = vsel %vm114, %v54, 0
  %v164 = vsel %vm114, %v55, 0
  %v167 = vsel %vm114, %v56, 0
  %v170 = vsel %vm114, %v57, 0
  %v173 = vsel %vm114, %v58, 0
  %v176 = vsel %vm114, %v59, 0
  %v179 = vsel %vm114, %v60, 0
  %v182 = vsel %vm114, %v61, 0
  %v185 = vsel %vm114, %v62, 0
  %v188 = vsel %vm114, %v63, 0
  %v191 = vsel %vm114, %v64, 0
  %v194 = vsel %vm114, %v65, 0
  %v197 = vsel %vm114, %v66, 0
  %v200 = vsel %vm114, %v67, 0
  %v203 = vsel %vm114, %v68, 0
  %v206 = vsel %vm114, %v69, 0
  %v209 = vsel %vm114, %v70, 0
  %v212 = vsel %vm114, %v71, 0
  %v215 = vsel %vm114, %v72, 0
  %v218 = vsel %vm114, %v73, 0
  %v221 = vsel %vm114, %v74, 0
  %v224 = vsel %vm114, %v75, 0
  %v227 = vsel %vm114, %v76, 0
  %v230 = vsel %vm114, %v77, 0
  %v233 = vsel %vm114, %v78, 0
  %v236 = vsel %vm114, %v79, 0
  %v239 = vsel %vm114, %v80, 0
  %v242 = vsel %vm114, %v81, 0
  %v245 = vsel %vm114, %v82, 0
  %v248 = vsel %vm114, %v83, 0
  %v251 = vsel %vm114, %v84, 0
  %v254 = vsel %vm114, %v85, 0
  %v257 = vsel %vm114, %v86, 0
  %v260 = vsel %vm114, %v87, 0
  %v263 = vsel %vm114, %v88, 0
  %v266 = vsel %vm114, %v89, 0
  %v269 = vsel %vm114, %v90, 0
  %v272 = vsel %vm114, %v91, 0
  %v275 = vsel %vm114, %v92, 0
  %v278 = vsel %vm114, %v93, 0
  %v281 = vsel %vm114, %v94, 0
  %v284 = vsel %vm114, %v95, 0
  %v287 = vsel %vm114, %v96, 0
  %v290 = vsel %vm114, %v97, 0
  %v293 = vsel %vm114, %v98, 0
  %v296 = vsel %vm114, %v99, 0
  %v299 = vsel %vm114, %v100, 0
  %v302 = vsel %vm114, %v101, 0
  %v305 = vsel %vm114, %v102, 0
  %vm307 = vcmask 1043456
  %v309 = vsel %vm307, %v107, 0
  %311 = vmatprep.subr.mxu0 0.0
  %312 = vmatpush1.msra.mxu0 %v103
  %313 = vmatprep.subr.mxu0 0.0
  %314 = vmatpush1.msra.mxu0 %v104
  %315 = vmatprep.subr.mxu0 0.0
  %316 = vmatpush1.msra.mxu0 %v105
  %317 = vmatprep.subr.mxu0 0.0
  %318 = vmatpush1.msra.mxu0 %v106
  %319 = vmatprep.subr.mxu0 0.0
  %320 = vmatpush1.msra.mxu0 %v309
  %321 = vmatprep.subr.mxu0 0.0
  %322 = vmatpush1.msra.mxu0 0.0
  %323 = vmatprep.subr.mxu0 0.0
  %324 = vmatpush1.msra.mxu0 0.0
  %325 = vmatprep.subr.mxu0 0.0
  %326 = vmatpush1.msra.mxu0 0.0
  %327 = vmatprep.subr.mxu0 0.0
  %328 = vmatpush1.msra.mxu0 0.0
  %329 = vmatprep.subr.mxu0 0.0
  %330 = vmatpush1.msra.mxu0 0.0
  %331 = vmatprep.subr.mxu0 0.0
  %332 = vmatpush1.msra.mxu0 0.0
  %333 = vmatprep.subr.mxu0 0.0
  %334 = vmatpush1.msra.mxu0 0.0
  %335 = vmatprep.subr.mxu0 0.0
  %336 = vmatpush1.msra.mxu0 0.0
  %337 = vmatprep.subr.mxu0 0.0
  %338 = vmatpush1.msra.mxu0 0.0
  %339 = vmatprep.subr.mxu0 0.0
  %340 = vmatpush1.msra.mxu0 0.0
  %341 = vmatprep.subr.mxu0 0.0
  %342 = vmatpush1.msra.mxu0 0.0
  %343 = vmatprep.subr.mxu0 0.0
  %344 = vmatpush1.msra.mxu0 0.0
  %345 = vmatprep.subr.mxu0 0.0
  %346 = vmatpush1.msra.mxu0 0.0
  %347 = vmatprep.subr.mxu0 0.0
  %348 = vmatpush1.msra.mxu0 0.0
  %349 = vmatprep.subr.mxu0 0.0
  %350 = vmatpush1.msra.mxu0 0.0
  %351 = vmatprep.subr.mxu0 0.0
  %352 = vmatpush1.msra.mxu0 0.0
  %353 = vmatprep.subr.mxu0 0.0
  %354 = vmatpush1.msra.mxu0 0.0
  %355 = vmatprep.subr.mxu0 0.0
  %356 = vmatpush1.msra.mxu0 0.0
  %357 = vmatprep.subr.mxu0 0.0
  %358 = vmatpush1.msra.mxu0 0.0
  %359 = vmatprep.subr.mxu0 0.0
  %360 = vmatpush1.msra.mxu0 0.0
  %361 = vmatprep.subr.mxu0 0.0
  %362 = vmatpush1.msra.mxu0 0.0
  %363 = vmatprep.subr.mxu0 0.0
  %364 = vmatpush1.msra.mxu0 0.0
  %365 = vmatprep.subr.mxu0 0.0
  %366 = vmatpush1.msra.mxu0 0.0
  %367 = vmatprep.subr.mxu0 0.0
  %368 = vmatpush1.msra.mxu0 0.0
  %369 = vmatprep.subr.mxu0 0.0
  %370 = vmatpush1.msra.mxu0 0.0
  %371 = vmatprep.subr.mxu0 0.0
  %372 = vmatpush1.msra.mxu0 0.0
  %373 = vmatprep.subr.mxu0 0.0
  %374 = vmatpush1.msra.mxu0 0.0
  %375 = vmatprep.mubr.f32.mxu0 0.0
  %376 = vmatmul.mubr.f32.gmra.mrb[0].mxu0 %v116
  %v377 = vpop.f32.mrb[0].mxu0
  %v378 = vadd.f32 %v112, %v377
  %v379 = vpop.f32.mrb[0].mxu0
  %380 = vmatprep.mubr.f32.mxu0 0.0
  %381 = vmatmul.mubr.f32.gmra.mrb[0].mxu0 %v119
  %v382 = vpop.f32.mrb[0].mxu0
  %v383 = vadd.f32 %v112, %v382
  %v384 = vpop.f32.mrb[0].mxu0
  %385 = vmatprep.mubr.f32.mxu0 0.0
  %386 = vmatmul.mubr.f32.gmra.mrb[0].mxu0 %v122
  %v387 = vpop.f32.mrb[0].mxu0
  %v388 = vadd.f32 %v112, %v387
  %v389 = vpop.f32.mrb[0].mxu0
  %390 = vmatprep.mubr.f32.mxu0 0.0
  %391 = vmatmul.mubr.f32.gmra.mrb[0].mxu0 %v125
  %v392 = vpop.f32.mrb[0].mxu0
  %v393 = vadd.f32 %v112, %v392
  %v394 = vpop.f32.mrb[0].mxu0
  %395 = vmatprep.mubr.f32.mxu0 0.0
  %396 = vmatmul.mubr.f32.gmra.mrb[0].mxu0 %v128
  %v397 = vpop.f32.mrb[0].mxu0
  %v398 = vadd.f32 %v112, %v397
  %v399 = vpop.f32.mrb[0].mxu0
  %400 = vmatprep.mubr.f32.mxu0 0.0
  %401 = vmatmul.mubr.f32.gmra.mrb[0].mxu0 %v131
  %v402 = vpop.f32.mrb[0].mxu0
  %v403 = vadd.f32 %v112, %v402
  %v404 = vpop.f32.mrb[0].mxu0
  %405 = vmatprep.mubr.f32.mxu0 0.0
  %406 = vmatmul.mubr.f32.gmra.mrb[0].mxu0 %v134
  %v407 = vpop.f32.mrb[0].mxu0
  %v408 = vadd.f32 %v112, %v407
  %v409 = vpop.f32.mrb[0].mxu0
  %410 = vmatprep.mubr.f32.mxu0 0.0
  %411 = vmatmul.mubr.f32.gmra.mrb[0].mxu0 %v137
  %v412 = vpop.f32.mrb[0].mxu0
  %v413 = vadd.f32 %v112, %v412
  %v414 = vpop.f32.mrb[0].mxu0
  %415 = vmatprep.mubr.f32.mxu0 0.0
  %416 = vmatmul.mubr.f32.gmra.mrb[0].mxu0 %v140
  %v417 = vpop.f32.mrb[0].mxu0
  %v418 = vadd.f32 %v112, %v417
  %v419 = vpop.f32.mrb[0].mxu0
  %420 = vmatprep.mubr.f32.mxu0 0.0
  %421 = vmatmul.mubr.f32.gmra.mrb[0].mxu0 %v143
  %v422 = vpop.f32.mrb[0].mxu0
  %v423 = vadd.f32 %v112, %v422
  %v424 = vpop.f32.mrb[0].mxu0
  %425 = vmatprep.mubr.f32.mxu0 0.0
  %426 = vmatmul.mubr.f32.gmra.mrb[0].mxu0 %v146
  %v427 = vpop.f32.mrb[0].mxu0
  %v428 = vadd.f32 %v112, %v427
  %v429 = vpop.f32.mrb[0].mxu0
  %430 = vmatprep.mubr.f32.mxu0 0.0
  %431 = vmatmul.mubr.f32.gmra.mrb[0].mxu0 %v149
  %v432 = vpop.f32.mrb[0].mxu0
  %v433 = vadd.f32 %v112, %v432
  %v434 = vpop.f32.mrb[0].mxu0
  %435 = vmatprep.mubr.f32.mxu0 0.0
  %436 = vmatmul.mubr.f32.gmra.mrb[0].mxu0 %v152
  %v437 = vpop.f32.mrb[0].mxu0
  %v438 = vadd.f32 %v112, %v437
  %v439 = vpop.f32.mrb[0].mxu0
  %440 = vmatprep.mubr.f32.mxu0 0.0
  %441 = vmatmul.mubr.f32.gmra.mrb[0].mxu0 %v155
  %v442 = vpop.f32.mrb[0].mxu0
  %v443 = vadd.f32 %v112, %v442
  %v444 = vpop.f32.mrb[0].mxu0
  %445 = vmatprep.mubr.f32.mxu0 0.0
  %446 = vmatmul.mubr.f32.gmra.mrb[0].mxu0 %v158
  %v447 = vpop.f32.mrb[0].mxu0
  %v448 = vadd.f32 %v112, %v447
  %v449 = vpop.f32.mrb[0].mxu0
  %450 = vmatprep.mubr.f32.mxu0 0.0
  %451 = vmatmul.mubr.f32.gmra.mrb[0].mxu0 %v161
  %v452 = vpop.f32.mrb[0].mxu0
  %v453 = vadd.f32 %v112, %v452
  %v454 = vpop.f32.mrb[0].mxu0
  %455 = vmatprep.mubr.f32.mxu0 0.0
  %456 = vmatmul.mubr.f32.gmra.mrb[0].mxu0 %v164
  %v457 = vpop.f32.mrb[0].mxu0
  %v458 = vadd.f32 %v112, %v457
  %v459 = vpop.f32.mrb[0].mxu0
  %460 = vmatprep.mubr.f32.mxu0 0.0
  %461 = vmatmul.mubr.f32.gmra.mrb[0].mxu0 %v167
  %v462 = vpop.f32.mrb[0].mxu0
  %v463 = vadd.f32 %v112, %v462
  %v464 = vpop.f32.mrb[0].mxu0
  %465 = vmatprep.mubr.f32.mxu0 0.0
  %466 = vmatmul.mubr.f32.gmra.mrb[0].mxu0 %v170
  %v467 = vpop.f32.mrb[0].mxu0
  %v468 = vadd.f32 %v112, %v467
  %v469 = vpop.f32.mrb[0].mxu0
  %470 = vmatprep.mubr.f32.mxu0 0.0
  %471 = vmatmul.mubr.f32.gmra.mrb[0].mxu0 %v173
  %v472 = vpop.f32.mrb[0].mxu0
  %v473 = vadd.f32 %v112, %v472
  %v474 = vpop.f32.mrb[0].mxu0
  %475 = vmatprep.mubr.f32.mxu0 0.0
  %476 = vmatmul.mubr.f32.gmra.mrb[0].mxu0 %v176
  %v477 = vpop.f32.mrb[0].mxu0
  %v478 = vadd.f32 %v112, %v477
  %v479 = vpop.f32.mrb[0].mxu0
  %480 = vmatprep.mubr.f32.mxu0 0.0
  %481 = vmatmul.mubr.f32.gmra.mrb[0].mxu0 %v179
  %v482 = vpop.f32.mrb[0].mxu0
  %v483 = vadd.f32 %v112, %v482
  %v484 = vpop.f32.mrb[0].mxu0
  %485 = vmatprep.mubr.f32.mxu0 0.0
  %486 = vmatmul.mubr.f32.gmra.mrb[0].mxu0 %v182
  %v487 = vpop.f32.mrb[0].mxu0
  %v488 = vadd.f32 %v112, %v487
  %v489 = vpop.f32.mrb[0].mxu0
  %490 = vmatprep.mubr.f32.mxu0 0.0
  %491 = vmatmul.mubr.f32.gmra.mrb[0].mxu0 %v185
  %v492 = vpop.f32.mrb[0].mxu0
  %v493 = vadd.f32 %v112, %v492
  %v494 = vpop.f32.mrb[0].mxu0
  %495 = vmatprep.mubr.f32.mxu0 0.0
  %496 = vmatmul.mubr.f32.gmra.mrb[0].mxu0 %v188
  %v497 = vpop.f32.mrb[0].mxu0
  %v498 = vadd.f32 %v112, %v497
  %v499 = vpop.f32.mrb[0].mxu0
  %500 = vmatprep.mubr.f32.mxu0 0.0
  %501 = vmatmul.mubr.f32.gmra.mrb[0].mxu0 %v191
  %v502 = vpop.f32.mrb[0].mxu0
  %v503 = vadd.f32 %v112, %v502
  %v504 = vpop.f32.mrb[0].mxu0
  %505 = vmatprep.mubr.f32.mxu0 0.0
  %506 = vmatmul.mubr.f32.gmra.mrb[0].mxu0 %v194
  %v507 = vpop.f32.mrb[0].mxu0
  %v508 = vadd.f32 %v112, %v507
  %v509 = vpop.f32.mrb[0].mxu0
  %510 = vmatprep.mubr.f32.mxu0 0.0
  %511 = vmatmul.mubr.f32.gmra.mrb[0].mxu0 %v197
  %v512 = vpop.f32.mrb[0].mxu0
  %v513 = vadd.f32 %v112, %v512
  %v514 = vpop.f32.mrb[0].mxu0
  %515 = vmatprep.mubr.f32.mxu0 0.0
  %516 = vmatmul.mubr.f32.gmra.mrb[0].mxu0 %v200
  %v517 = vpop.f32.mrb[0].mxu0
  %v518 = vadd.f32 %v112, %v517
  %v519 = vpop.f32.mrb[0].mxu0
  %520 = vmatprep.mubr.f32.mxu0 0.0
  %521 = vmatmul.mubr.f32.gmra.mrb[0].mxu0 %v203
  %v522 = vpop.f32.mrb[0].mxu0
  %v523 = vadd.f32 %v112, %v522
  %v524 = vpop.f32.mrb[0].mxu0
  %525 = vmatprep.mubr.f32.mxu0 0.0
  %526 = vmatmul.mubr.f32.gmra.mrb[0].mxu0 %v206
  %v527 = vpop.f32.mrb[0].mxu0
  %v528 = vadd.f32 %v112, %v527
  %v529 = vpop.f32.mrb[0].mxu0
  %530 = vmatprep.mubr.f32.mxu0 0.0
  %531 = vmatmul.mubr.f32.gmra.mrb[0].mxu0 %v209
  %v532 = vpop.f32.mrb[0].mxu0
  %v533 = vadd.f32 %v112, %v532
  %v534 = vpop.f32.mrb[0].mxu0
  %535 = vmatprep.mubr.f32.mxu0 0.0
  %536 = vmatmul.mubr.f32.gmra.mrb[0].mxu0 %v212
  %v537 = vpop.f32.mrb[0].mxu0
  %v538 = vadd.f32 %v112, %v537
  %v539 = vpop.f32.mrb[0].mxu0
  %540 = vmatprep.mubr.f32.mxu0 0.0
  %541 = vmatmul.mubr.f32.gmra.mrb[0].mxu0 %v215
  %v542 = vpop.f32.mrb[0].mxu0
  %v543 = vadd.f32 %v112, %v542
  %v544 = vpop.f32.mrb[0].mxu0
  %545 = vmatprep.mubr.f32.mxu0 0.0
  %546 = vmatmul.mubr.f32.gmra.mrb[0].mxu0 %v218
  %v547 = vpop.f32.mrb[0].mxu0
  %v548 = vadd.f32 %v112, %v547
  %v549 = vpop.f32.mrb[0].mxu0
  %550 = vmatprep.mubr.f32.mxu0 0.0
  %551 = vmatmul.mubr.f32.gmra.mrb[0].mxu0 %v221
  %v552 = vpop.f32.mrb[0].mxu0
  %v553 = vadd.f32 %v112, %v552
  %v554 = vpop.f32.mrb[0].mxu0
  %555 = vmatprep.mubr.f32.mxu0 0.0
  %556 = vmatmul.mubr.f32.gmra.mrb[0].mxu0 %v224
  %v557 = vpop.f32.mrb[0].mxu0
  %v558 = vadd.f32 %v112, %v557
  %v559 = vpop.f32.mrb[0].mxu0
  %560 = vmatprep.mubr.f32.mxu0 0.0
  %561 = vmatmul.mubr.f32.gmra.mrb[0].mxu0 %v227
  %v562 = vpop.f32.mrb[0].mxu0
  %v563 = vadd.f32 %v112, %v562
  %v564 = vpop.f32.mrb[0].mxu0
  %565 = vmatprep.mubr.f32.mxu0 0.0
  %566 = vmatmul.mubr.f32.gmra.mrb[0].mxu0 %v230
  %v567 = vpop.f32.mrb[0].mxu0
  %v568 = vadd.f32 %v112, %v567
  %v569 = vpop.f32.mrb[0].mxu0
  %570 = vmatprep.mubr.f32.mxu0 0.0
  %571 = vmatmul.mubr.f32.gmra.mrb[0].mxu0 %v233
  %v572 = vpop.f32.mrb[0].mxu0
  %v573 = vadd.f32 %v112, %v572
  %v574 = vpop.f32.mrb[0].mxu0
  %575 = vmatprep.mubr.f32.mxu0 0.0
  %576 = vmatmul.mubr.f32.gmra.mrb[0].mxu0 %v236
  %v577 = vpop.f32.mrb[0].mxu0
  %v578 = vadd.f32 %v112, %v577
  %v579 = vpop.f32.mrb[0].mxu0
  %580 = vmatprep.mubr.f32.mxu0 0.0
  %581 = vmatmul.mubr.f32.gmra.mrb[0].mxu0 %v239
  %v582 = vpop.f32.mrb[0].mxu0
  %v583 = vadd.f32 %v112, %v582
  %v584 = vpop.f32.mrb[0].mxu0
  %585 = vmatprep.mubr.f32.mxu0 0.0
  %586 = vmatmul.mubr.f32.gmra.mrb[0].mxu0 %v242
  %v587 = vpop.f32.mrb[0].mxu0
  %v588 = vadd.f32 %v112, %v587
  %v589 = vpop.f32.mrb[0].mxu0
  %590 = vmatprep.mubr.f32.mxu0 0.0
  %591 = vmatmul.mubr.f32.gmra.mrb[0].mxu0 %v245
  %v592 = vpop.f32.mrb[0].mxu0
  %v593 = vadd.f32 %v112, %v592
  %v594 = vpop.f32.mrb[0].mxu0
  %595 = vmatprep.mubr.f32.mxu0 0.0
  %596 = vmatmul.mubr.f32.gmra.mrb[0].mxu0 %v248
  %v597 = vpop.f32.mrb[0].mxu0
  %v598 = vadd.f32 %v112, %v597
  %v599 = vpop.f32.mrb[0].mxu0
  %600 = vmatprep.mubr.f32.mxu0 0.0
  %601 = vmatmul.mubr.f32.gmra.mrb[0].mxu0 %v251
  %v602 = vpop.f32.mrb[0].mxu0
  %v603 = vadd.f32 %v112, %v602
  %v604 = vpop.f32.mrb[0].mxu0
  %605 = vmatprep.mubr.f32.mxu0 0.0
  %606 = vmatmul.mubr.f32.gmra.mrb[0].mxu0 %v254
  %v607 = vpop.f32.mrb[0].mxu0
  %v608 = vadd.f32 %v112, %v607
  %v609 = vpop.f32.mrb[0].mxu0
  %610 = vmatprep.mubr.f32.mxu0 0.0
  %611 = vmatmul.mubr.f32.gmra.mrb[0].mxu0 %v257
  %v612 = vpop.f32.mrb[0].mxu0
  %v613 = vadd.f32 %v112, %v612
  %v614 = vpop.f32.mrb[0].mxu0
  %615 = vmatprep.mubr.f32.mxu0 0.0
  %616 = vmatmul.mubr.f32.gmra.mrb[0].mxu0 %v260
  %v617 = vpop.f32.mrb[0].mxu0
  %v618 = vadd.f32 %v112, %v617
  %v619 = vpop.f32.mrb[0].mxu0
  %620 = vmatprep.mubr.f32.mxu0 0.0
  %621 = vmatmul.mubr.f32.gmra.mrb[0].mxu0 %v263
  %v622 = vpop.f32.mrb[0].mxu0
  %v623 = vadd.f32 %v112, %v622
  %v624 = vpop.f32.mrb[0].mxu0
  %625 = vmatprep.mubr.f32.mxu0 0.0
  %626 = vmatmul.mubr.f32.gmra.mrb[0].mxu0 %v266
  %v627 = vpop.f32.mrb[0].mxu0
  %v628 = vadd.f32 %v112, %v627
  %v629 = vpop.f32.mrb[0].mxu0
  %630 = vmatprep.mubr.f32.mxu0 0.0
  %631 = vmatmul.mubr.f32.gmra.mrb[0].mxu0 %v269
  %v632 = vpop.f32.mrb[0].mxu0
  %v633 = vadd.f32 %v112, %v632
  %v634 = vpop.f32.mrb[0].mxu0
  %635 = vmatprep.mubr.f32.mxu0 0.0
  %636 = vmatmul.mubr.f32.gmra.mrb[0].mxu0 %v272
  %v637 = vpop.f32.mrb[0].mxu0
  %v638 = vadd.f32 %v112, %v637
  %v639 = vpop.f32.mrb[0].mxu0
  %640 = vmatprep.mubr.f32.mxu0 0.0
  %641 = vmatmul.mubr.f32.gmra.mrb[0].mxu0 %v275
  %v642 = vpop.f32.mrb[0].mxu0
  %v643 = vadd.f32 %v112, %v642
  %v644 = vpop.f32.mrb[0].mxu0
  %645 = vmatprep.mubr.f32.mxu0 0.0
  %646 = vmatmul.mubr.f32.gmra.mrb[0].mxu0 %v278
  %v647 = vpop.f32.mrb[0].mxu0
  %v648 = vadd.f32 %v112, %v647
  %v649 = vpop.f32.mrb[0].mxu0
  %650 = vmatprep.mubr.f32.mxu0 0.0
  %651 = vmatmul.mubr.f32.gmra.mrb[0].mxu0 %v281
  %v652 = vpop.f32.mrb[0].mxu0
  %v653 = vadd.f32 %v112, %v652
  %v654 = vpop.f32.mrb[0].mxu0
  %655 = vmatprep.mubr.f32.mxu0 0.0
  %656 = vmatmul.mubr.f32.gmra.mrb[0].mxu0 %v284
  %v657 = vpop.f32.mrb[0].mxu0
  %v658 = vadd.f32 %v112, %v657
  %v659 = vpop.f32.mrb[0].mxu0
  %660 = vmatprep.mubr.f32.mxu0 0.0
  %661 = vmatmul.mubr.f32.gmra.mrb[0].mxu0 %v287
  %v662 = vpop.f32.mrb[0].mxu0
  %v663 = vadd.f32 %v112, %v662
  %v664 = vpop.f32.mrb[0].mxu0
  %665 = vmatprep.mubr.f32.mxu0 0.0
  %666 = vmatmul.mubr.f32.gmra.mrb[0].mxu0 %v290
  %v667 = vpop.f32.mrb[0].mxu0
  %v668 = vadd.f32 %v112, %v667
  %v669 = vpop.f32.mrb[0].mxu0
  %670 = vmatprep.mubr.f32.mxu0 0.0
  %671 = vmatmul.mubr.f32.gmra.mrb[0].mxu0 %v293
  %v672 = vpop.f32.mrb[0].mxu0
  %v673 = vadd.f32 %v112, %v672
  %v674 = vpop.f32.mrb[0].mxu0
  %675 = vmatprep.mubr.f32.mxu0 0.0
  %676 = vmatmul.mubr.f32.gmra.mrb[0].mxu0 %v296
  %v677 = vpop.f32.mrb[0].mxu0
  %v678 = vadd.f32 %v112, %v677
  %v679 = vpop.f32.mrb[0].mxu0
  %680 = vmatprep.mubr.f32.mxu0 0.0
  %681 = vmatmul.mubr.f32.gmra.mrb[0].mxu0 %v299
  %v682 = vpop.f32.mrb[0].mxu0
  %v683 = vadd.f32 %v112, %v682
  %v684 = vpop.f32.mrb[0].mxu0
  %685 = vmatprep.mubr.f32.mxu0 0.0
  %686 = vmatmul.mubr.f32.gmra.mrb[0].mxu0 %v302
  %v687 = vpop.f32.mrb[0].mxu0
  %v688 = vadd.f32 %v112, %v687
  %v689 = vpop.f32.mrb[0].mxu0
  %690 = vmatprep.mubr.f32.mxu0 0.0
  %691 = vmatmul.mubr.f32.gmra.mrb[0].mxu0 %v305
  %v692 = vpop.f32.mrb[0].mxu0
  %v693 = vadd.f32 %v112, %v692
  %v694 = vpop.f32.mrb[0].mxu0
  %695 = vdwg.mxu0
  %v696 = vmax.f32 %v378, 0.0
  %v697 = vmax.f32 %v383, 0.0
  %v698 = vmax.f32 %v388, 0.0
  %v699 = vmax.f32 %v393, 0.0
  %v700 = vmax.f32 %v398, 0.0
  %v701 = vmax.f32 %v403, 0.0
  %v702 = vmax.f32 %v408, 0.0
  %v703 = vmax.f32 %v413, 0.0
  %v704 = vmax.f32 %v418, 0.0
  %v705 = vmax.f32 %v423, 0.0
  %v706 = vmax.f32 %v428, 0.0
  %v707 = vmax.f32 %v433, 0.0
  %v708 = vmax.f32 %v438, 0.0
  %v709 = vmax.f32 %v443, 0.0
  %v710 = vmax.f32 %v448, 0.0
  %v711 = vmax.f32 %v453, 0.0
  %v712 = vmax.f32 %v458, 0.0
  %v713 = vmax.f32 %v463, 0.0
  %v714 = vmax.f32 %v468, 0.0
  %v715 = vmax.f32 %v473, 0.0
  %v716 = vmax.f32 %v478, 0.0
  %v717 = vmax.f32 %v483, 0.0
  %v718 = vmax.f32 %v488, 0.0
  %v719 = vmax.f32 %v493, 0.0
  %v720 = vmax.f32 %v498, 0.0
  %v721 = vmax.f32 %v503, 0.0
  %v722 = vmax.f32 %v508, 0.0
  %v723 = vmax.f32 %v513, 0.0
  %v724 = vmax.f32 %v518, 0.0
  %v725 = vmax.f32 %v523, 0.0
  %v726 = vmax.f32 %v528, 0.0
  %v727 = vmax.f32 %v533, 0.0
  %v728 = vmax.f32 %v538, 0.0
  %v729 = vmax.f32 %v543, 0.0
  %v730 = vmax.f32 %v548, 0.0
  %v731 = vmax.f32 %v553, 0.0
  %v732 = vmax.f32 %v558, 0.0
  %v733 = vmax.f32 %v563, 0.0
  %v734 = vmax.f32 %v568, 0.0
  %v735 = vmax.f32 %v573, 0.0
  %v736 = vmax.f32 %v578, 0.0
  %v737 = vmax.f32 %v583, 0.0
  %v738 = vmax.f32 %v588, 0.0
  %v739 = vmax.f32 %v593, 0.0
  %v740 = vmax.f32 %v598, 0.0
  %v741 = vmax.f32 %v603, 0.0
  %v742 = vmax.f32 %v608, 0.0
  %v743 = vmax.f32 %v613, 0.0
  %v744 = vmax.f32 %v618, 0.0
  %v745 = vmax.f32 %v623, 0.0
  %v746 = vmax.f32 %v628, 0.0
  %v747 = vmax.f32 %v633, 0.0
  %v748 = vmax.f32 %v638, 0.0
  %v749 = vmax.f32 %v643, 0.0
  %v750 = vmax.f32 %v648, 0.0
  %v751 = vmax.f32 %v653, 0.0
  %v752 = vmax.f32 %v658, 0.0
  %v753 = vmax.f32 %v663, 0.0
  %v754 = vmax.f32 %v668, 0.0
  %v755 = vmax.f32 %v673, 0.0
  %v756 = vmax.f32 %v678, 0.0
  %v757 = vmax.f32 %v683, 0.0
  %v758 = vmax.f32 %v688, 0.0
  %v759 = vmax.f32 %v693, 0.0
  %vm760 = vcmask 64512
  %v761 = vsel %vm760, %v696, 0.0
  %v762 = vsel %vm760, %v697, 0.0
  %v763 = vadd.f32 %v761, %v762
  %v764 = vsel %vm760, %v698, 0.0
  %v765 = vadd.f32 %v763, %v764
  %v766 = vsel %vm760, %v699, 0.0
  %v767 = vadd.f32 %v765, %v766
  %v768 = vsel %vm760, %v700, 0.0
  %v769 = vadd.f32 %v767, %v768
  %v770 = vsel %vm760, %v701, 0.0
  %v771 = vadd.f32 %v769, %v770
  %v772 = vsel %vm760, %v702, 0.0
  %v773 = vadd.f32 %v771, %v772
  %v774 = vsel %vm760, %v703, 0.0
  %v775 = vadd.f32 %v773, %v774
  %v776 = vsel %vm760, %v704, 0.0
  %v777 = vadd.f32 %v775, %v776
  %v778 = vsel %vm760, %v705, 0.0
  %v779 = vadd.f32 %v777, %v778
  %v780 = vsel %vm760, %v706, 0.0
  %v781 = vadd.f32 %v779, %v780
  %v782 = vsel %vm760, %v707, 0.0
  %v783 = vadd.f32 %v781, %v782
  %v784 = vsel %vm760, %v708, 0.0
  %v785 = vadd.f32 %v783, %v784
  %v786 = vsel %vm760, %v709, 0.0
  %v787 = vadd.f32 %v785, %v786
  %v788 = vsel %vm760, %v710, 0.0
  %v789 = vadd.f32 %v787, %v788
  %v790 = vsel %vm760, %v711, 0.0
  %v791 = vadd.f32 %v789, %v790
  %v792 = vsel %vm760, %v712, 0.0
  %v793 = vadd.f32 %v791, %v792
  %v794 = vsel %vm760, %v713, 0.0
  %v795 = vadd.f32 %v793, %v794
  %v796 = vsel %vm760, %v714, 0.0
  %v797 = vadd.f32 %v795, %v796
  %v798 = vsel %vm760, %v715, 0.0
  %v799 = vadd.f32 %v797, %v798
  %v800 = vsel %vm760, %v716, 0.0
  %v801 = vadd.f32 %v799, %v800
  %v802 = vsel %vm760, %v717, 0.0
  %v803 = vadd.f32 %v801, %v802
  %v804 = vsel %vm760, %v718, 0.0
  %v805 = vadd.f32 %v803, %v804
  %v806 = vsel %vm760, %v719, 0.0
  %v807 = vadd.f32 %v805, %v806
  %v808 = vsel %vm760, %v720, 0.0
  %v809 = vadd.f32 %v807, %v808
  %v810 = vsel %vm760, %v721, 0.0
  %v811 = vadd.f32 %v809, %v810
  %v812 = vsel %vm760, %v722, 0.0
  %v813 = vadd.f32 %v811, %v812
  %v814 = vsel %vm760, %v723, 0.0
  %v815 = vadd.f32 %v813, %v814
  %v816 = vsel %vm760, %v724, 0.0
  %v817 = vadd.f32 %v815, %v816
  %v818 = vsel %vm760, %v725, 0.0
  %v819 = vadd.f32 %v817, %v818
  %v820 = vsel %vm760, %v726, 0.0
  %v821 = vadd.f32 %v819, %v820
  %v822 = vsel %vm760, %v727, 0.0
  %v823 = vadd.f32 %v821, %v822
  %v824 = vrot.slane %v823, 4
  %v825 = vadd.f32 %v823, %v824
  %v826 = vrot.slane %v825, 2
  %v827 = vadd.f32 %v825, %v826
  %v828 = vrot.slane %v827, 1
  %v829 = vadd.f32 %v827, %v828
  %v830 = vsel %vm760, %v728, 0.0
  %v831 = vsel %vm760, %v729, 0.0
  %v832 = vadd.f32 %v830, %v831
  %v833 = vsel %vm760, %v730, 0.0
  %v834 = vadd.f32 %v832, %v833
  %v835 = vsel %vm760, %v731, 0.0
  %v836 = vadd.f32 %v834, %v835
  %v837 = vsel %vm760, %v732, 0.0
  %v838 = vadd.f32 %v836, %v837
  %v839 = vsel %vm760, %v733, 0.0
  %v840 = vadd.f32 %v838, %v839
  %v841 = vsel %vm760, %v734, 0.0
  %v842 = vadd.f32 %v840, %v841
  %v843 = vsel %vm760, %v735, 0.0
  %v844 = vadd.f32 %v842, %v843
  %v845 = vsel %vm760, %v736, 0.0
  %v846 = vadd.f32 %v844, %v845
  %v847 = vsel %vm760, %v737, 0.0
  %v848 = vadd.f32 %v846, %v847
  %v849 = vsel %vm760, %v738, 0.0
  %v850 = vadd.f32 %v848, %v849
  %v851 = vsel %vm760, %v739, 0.0
  %v852 = vadd.f32 %v850, %v851
  %v853 = vsel %vm760, %v740, 0.0
  %v854 = vadd.f32 %v852, %v853
  %v855 = vsel %vm760, %v741, 0.0
  %v856 = vadd.f32 %v854, %v855
  %v857 = vsel %vm760, %v742, 0.0
  %v858 = vadd.f32 %v856, %v857
  %v859 = vsel %vm760, %v743, 0.0
  %v860 = vadd.f32 %v858, %v859
  %v861 = vsel %vm760, %v744, 0.0
  %v862 = vadd.f32 %v860, %v861
  %v863 = vsel %vm760, %v745, 0.0
  %v864 = vadd.f32 %v862, %v863
  %v865 = vsel %vm760, %v746, 0.0
  %v866 = vadd.f32 %v864, %v865
  %v867 = vsel %vm760, %v747, 0.0
  %v868 = vadd.f32 %v866, %v867
  %v869 = vsel %vm760, %v748, 0.0
  %v870 = vadd.f32 %v868, %v869
  %v871 = vsel %vm760, %v749, 0.0
  %v872 = vadd.f32 %v870, %v871
  %v873 = vsel %vm760, %v750, 0.0
  %v874 = vadd.f32 %v872, %v873
  %v875 = vsel %vm760, %v751, 0.0
  %v876 = vadd.f32 %v874, %v875
  %v877 = vsel %vm760, %v752, 0.0
  %v878 = vadd.f32 %v876, %v877
  %v879 = vsel %vm760, %v753, 0.0
  %v880 = vadd.f32 %v878, %v879
  %v881 = vsel %vm760, %v754, 0.0
  %v882 = vadd.f32 %v880, %v881
  %v883 = vsel %vm760, %v755, 0.0
  %v884 = vadd.f32 %v882, %v883
  %v885 = vsel %vm760, %v756, 0.0
  %v886 = vadd.f32 %v884, %v885
  %v887 = vsel %vm760, %v757, 0.0
  %v888 = vadd.f32 %v886, %v887
  %v889 = vsel %vm760, %v758, 0.0
  %v890 = vadd.f32 %v888, %v889
  %v891 = vsel %vm760, %v759, 0.0
  %v892 = vadd.f32 %v890, %v891
  %v893 = vrot.slane %v892, 4
  %v894 = vadd.f32 %v892, %v893
  %v895 = vrot.slane %v894, 2
  %v896 = vadd.f32 %v894, %v895
  %v897 = vrot.slane %v896, 1
  %v898 = vadd.f32 %v896, %v897
  %v899 = vrcp.pop 256.0
  %v900 = vmul.f32 %v829, %v899
  %v901 = vmul.f32 %v898, %v899
  %v902 = vld [vmem:[%s1] sm:$0xff]
  %v903 = vld [vmem:[%s1 + $0x8] sm:$0xff]
  %v904 = vld [vmem:[%s4] sm:$0xff]
  %905 = vrot.lane.b32.xlu0 %v112, 120
  %v906 = vpop.permute.xlu0 %905
  %v909 = vsel %vm760, %v902, 0
  %v912 = vsel %vm760, %v903, 0
  %914 = vmatprep.subr.mxu0 0.0
  %915 = vmatpush1.msra.mxu0 %v904
  %916 = vmatprep.subr.mxu0 0.0
  %917 = vmatpush1.msra.mxu0 0.0
  %918 = vmatprep.subr.mxu0 0.0
  %919 = vmatpush1.msra.mxu0 0.0
  %920 = vmatprep.subr.mxu0 0.0
  %921 = vmatpush1.msra.mxu0 0.0
  %922 = vmatprep.subr.mxu0 0.0
  %923 = vmatpush1.msra.mxu0 0.0
  %924 = vmatprep.subr.mxu0 0.0
  %925 = vmatpush1.msra.mxu0 0.0
  %926 = vmatprep.subr.mxu0 0.0
  %927 = vmatpush1.msra.mxu0 0.0
  %928 = vmatprep.subr.mxu0 0.0
  %929 = vmatpush1.msra.mxu0 0.0
  %930 = vmatprep.subr.mxu0 0.0
  %931 = vmatpush1.msra.mxu0 0.0
  %932 = vmatprep.subr.mxu0 0.0
  %933 = vmatpush1.msra.mxu0 0.0
  %934 = vmatprep.subr.mxu0 0.0
  %935 = vmatpush1.msra.mxu0 0.0
  %936 = vmatprep.subr.mxu0 0.0
  %937 = vmatpush1.msra.mxu0 0.0
  %938 = vmatprep.subr.mxu0 0.0
  %939 = vmatpush1.msra.mxu0 0.0
  %940 = vmatprep.subr.mxu0 0.0
  %941 = vmatpush1.msra.mxu0 0.0
  %942 = vmatprep.subr.mxu0 0.0
  %943 = vmatpush1.msra.mxu0 0.0
  %944 = vmatprep.subr.mxu0 0.0
  %945 = vmatpush1.msra.mxu0 0.0
  %946 = vmatprep.subr.mxu0 0.0
  %947 = vmatpush1.msra.mxu0 0.0
  %948 = vmatprep.subr.mxu0 0.0
  %949 = vmatpush1.msra.mxu0 0.0
  %950 = vmatprep.subr.mxu0 0.0
  %951 = vmatpush1.msra.mxu0 0.0
  %952 = vmatprep.subr.mxu0 0.0
  %953 = vmatpush1.msra.mxu0 0.0
  %954 = vmatprep.subr.mxu0 0.0
  %955 = vmatpush1.msra.mxu0 0.0
  %956 = vmatprep.subr.mxu0 0.0
  %957 = vmatpush1.msra.mxu0 0.0
  %958 = vmatprep.subr.mxu0 0.0
  %959 = vmatpush1.msra.mxu0 0.0
  %960 = vmatprep.subr.mxu0 0.0
  %961 = vmatpush1.msra.mxu0 0.0
  %962 = vmatprep.subr.mxu0 0.0
  %963 = vmatpush1.msra.mxu0 0.0
  %964 = vmatprep.subr.mxu0 0.0
  %965 = vmatpush1.msra.mxu0 0.0
  %966 = vmatprep.subr.mxu0 0.0
  %967 = vmatpush1.msra.mxu0 0.0
  %968 = vmatprep.subr.mxu0 0.0
  %969 = vmatpush1.msra.mxu0 0.0
  %970 = vmatprep.subr.mxu0 0.0
  %971 = vmatpush1.msra.mxu0 0.0
  %972 = vmatprep.subr.mxu0 0.0
  %973 = vmatpush1.msra.mxu0 0.0
  %974 = vmatprep.subr.mxu0 0.0
  %975 = vmatpush1.msra.mxu0 0.0
  %976 = vmatprep.subr.mxu0 0.0
  %977 = vmatpush1.msra.mxu0 0.0
  %978 = vmatprep.mubr.f32.mxu0 0.0
  %979 = vmatmul.mubr.f32.gmra.mrb[0].mxu0 %v909
  %v980 = vpop.f32.mrb[0].mxu0
  %v981 = vadd.f32 %v906, %v980
  %v982 = vpop.f32.mrb[0].mxu0
  %983 = vmatprep.mubr.f32.mxu0 0.0
  %984 = vmatmul.mubr.f32.gmra.mrb[0].mxu0 %v912
  %v985 = vpop.f32.mrb[0].mxu0
  %v986 = vadd.f32 %v906, %v985
  %v987 = vpop.f32.mrb[0].mxu0
  %988 = vdwg.mxu0
  %v989 = vld [vmem:[%s5] sm:$0xff]
  %v990 = vld [vmem:[%s5 + $0x8] sm:$0xff]
  %vm991 = vcmask 130048
  %v993 = vsel %vm991, 0.0, 0
  %995 = vmatprep.subr.mxu0 0.0
  %996 = vmatpush1.msra.mxu0 %v989
  %997 = vmatprep.subr.mxu0 0.0
  %998 = vmatpush1.msra.mxu0 %v990
  %999 = vmatprep.subr.mxu0 0.0
  %1000 = vmatpush1.msra.mxu0 0.0
  %1001 = vmatprep.subr.mxu0 0.0
  %1002 = vmatpush1.msra.mxu0 0.0
  %1003 = vmatprep.subr.mxu0 0.0
  %1004 = vmatpush1.msra.mxu0 0.0
  %1005 = vmatprep.subr.mxu0 0.0
  %1006 = vmatpush1.msra.mxu0 0.0
  %1007 = vmatprep.subr.mxu0 0.0
  %1008 = vmatpush1.msra.mxu0 0.0
  %1009 = vmatprep.subr.mxu0 0.0
  %1010 = vmatpush1.msra.mxu0 0.0
  %1011 = vmatprep.subr.mxu0 0.0
  %1012 = vmatpush1.msra.mxu0 0.0
  %1013 = vmatprep.subr.mxu0 0.0
  %1014 = vmatpush1.msra.mxu0 0.0
  %1015 = vmatprep.subr.mxu0 0.0
  %1016 = vmatpush1.msra.mxu0 0.0
  %1017 = vmatprep.subr.mxu0 0.0
  %1018 = vmatpush1.msra.mxu0 0.0
  %1019 = vmatprep.subr.mxu0 0.0
  %1020 = vmatpush1.msra.mxu0 0.0
  %1021 = vmatprep.subr.mxu0 0.0
  %1022 = vmatpush1.msra.mxu0 0.0
  %1023 = vmatprep.subr.mxu0 0.0
  %1024 = vmatpush1.msra.mxu0 0.0
  %1025 = vmatprep.subr.mxu0 0.0
  %1026 = vmatpush1.msra.mxu0 0.0
  %1027 = vmatprep.subr.mxu0 0.0
  %1028 = vmatpush1.msra.mxu0 0.0
  %1029 = vmatprep.subr.mxu0 0.0
  %1030 = vmatpush1.msra.mxu0 0.0
  %1031 = vmatprep.subr.mxu0 0.0
  %1032 = vmatpush1.msra.mxu0 0.0
  %1033 = vmatprep.subr.mxu0 0.0
  %1034 = vmatpush1.msra.mxu0 0.0
  %1035 = vmatprep.subr.mxu0 0.0
  %1036 = vmatpush1.msra.mxu0 0.0
  %1037 = vmatprep.subr.mxu0 0.0
  %1038 = vmatpush1.msra.mxu0 0.0
  %1039 = vmatprep.subr.mxu0 0.0
  %1040 = vmatpush1.msra.mxu0 0.0
  %1041 = vmatprep.subr.mxu0 0.0
  %1042 = vmatpush1.msra.mxu0 0.0
  %1043 = vmatprep.subr.mxu0 0.0
  %1044 = vmatpush1.msra.mxu0 0.0
  %1045 = vmatprep.subr.mxu0 0.0
  %1046 = vmatpush1.msra.mxu0 0.0
  %1047 = vmatprep.subr.mxu0 0.0
  %1048 = vmatpush1.msra.mxu0 0.0
  %1049 = vmatprep.subr.mxu0 0.0
  %1050 = vmatpush1.msra.mxu0 0.0
  %1051 = vmatprep.subr.mxu0 0.0
  %1052 = vmatpush1.msra.mxu0 0.0
  %1053 = vmatprep.subr.mxu0 0.0
  %1054 = vmatpush1.msra.mxu0 0.0
  %1055 = vmatprep.subr.mxu0 0.0
  %1056 = vmatpush1.msra.mxu0 0.0
  %1057 = vmatprep.subr.mxu0 0.0
  %1058 = vmatpush1.msra.mxu0 0.0
  %1059 = vmatprep.mubr.f32.mxu0 0.0
  %1060 = vmatmul.mubr.f32.gmra.mrb[0].mxu0 %v993
  %v1061 = vpop.f32.mrb[0].mxu0
  %v1062 = vadd.f32 0.0, %v1061
  %v1063 = vpop.f32.mrb[0].mxu0
  %1064 = vdwg.mxu0
  %v1065 = vadd.f32 %v981, %v1062
  %v1066 = vtanh.pop %v1065
  %v1068 = vsel %vm991, %v1066, 0
  %1070 = vmatprep.subr.mxu0 0.0
  %1071 = vmatpush1.msra.mxu0 %v989
  %1072 = vmatprep.subr.mxu0 0.0
  %1073 = vmatpush1.msra.mxu0 %v990
  %1074 = vmatprep.subr.mxu0 0.0
  %1075 = vmatpush1.msra.mxu0 0.0
  %1076 = vmatprep.subr.mxu0 0.0
  %1077 = vmatpush1.msra.mxu0 0.0
  %1078 = vmatprep.subr.mxu0 0.0
  %1079 = vmatpush1.msra.mxu0 0.0
  %1080 = vmatprep.subr.mxu0 0.0
  %1081 = vmatpush1.msra.mxu0 0.0
  %1082 = vmatprep.subr.mxu0 0.0
  %1083 = vmatpush1.msra.mxu0 0.0
  %1084 = vmatprep.subr.mxu0 0.0
  %1085 = vmatpush1.msra.mxu0 0.0
  %1086 = vmatprep.subr.mxu0 0.0
  %1087 = vmatpush1.msra.mxu0 0.0
  %1088 = vmatprep.subr.mxu0 0.0
  %1089 = vmatpush1.msra.mxu0 0.0
  %1090 = vmatprep.subr.mxu0 0.0
  %1091 = vmatpush1.msra.mxu0 0.0
  %1092 = vmatprep.subr.mxu0 0.0
  %1093 = vmatpush1.msra.mxu0 0.0
  %1094 = vmatprep.subr.mxu0 0.0
  %1095 = vmatpush1.msra.mxu0 0.0
  %1096 = vmatprep.subr.mxu0 0.0
  %1097 = vmatpush1.msra.mxu0 0.0
  %1098 = vmatprep.subr.mxu0 0.0
  %1099 = vmatpush1.msra.mxu0 0.0
  %1100 = vmatprep.subr.mxu0 0.0
  %1101 = vmatpush1.msra.mxu0 0.0
  %1102 = vmatprep.subr.mxu0 0.0
  %1103 = vmatpush1.msra.mxu0 0.0
  %1104 = vmatprep.subr.mxu0 0.0
  %1105 = vmatpush1.msra.mxu0 0.0
  %1106 = vmatprep.subr.mxu0 0.0
  %1107 = vmatpush1.msra.mxu0 0.0
  %1108 = vmatprep.subr.mxu0 0.0
  %1109 = vmatpush1.msra.mxu0 0.0
  %1110 = vmatprep.subr.mxu0 0.0
  %1111 = vmatpush1.msra.mxu0 0.0
  %1112 = vmatprep.subr.mxu0 0.0
  %1113 = vmatpush1.msra.mxu0 0.0
  %1114 = vmatprep.subr.mxu0 0.0
  %1115 = vmatpush1.msra.mxu0 0.0
  %1116 = vmatprep.subr.mxu0 0.0
  %1117 = vmatpush1.msra.mxu0 0.0
  %1118 = vmatprep.subr.mxu0 0.0
  %1119 = vmatpush1.msra.mxu0 0.0
  %1120 = vmatprep.subr.mxu0 0.0
  %1121 = vmatpush1.msra.mxu0 0.0
  %1122 = vmatprep.subr.mxu0 0.0
  %1123 = vmatpush1.msra.mxu0 0.0
  %1124 = vmatprep.subr.mxu0 0.0
  %1125 = vmatpush1.msra.mxu0 0.0
  %1126 = vmatprep.subr.mxu0 0.0
  %1127 = vmatpush1.msra.mxu0 0.0
  %1128 = vmatprep.subr.mxu0 0.0
  %1129 = vmatpush1.msra.mxu0 0.0
  %1130 = vmatprep.subr.mxu0 0.0
  %1131 = vmatpush1.msra.mxu0 0.0
  %1132 = vmatprep.subr.mxu0 0.0
  %1133 = vmatpush1.msra.mxu0 0.0
  %1134 = vmatprep.mubr.f32.mxu0 0.0
  %1135 = vmatmul.mubr.f32.gmra.mrb[0].mxu0 %v1068
  %v1136 = vpop.f32.mrb[0].mxu0
  %v1137 = vadd.f32 0.0, %v1136
  %v1138 = vpop.f32.mrb[0].mxu0
  %1139 = vdwg.mxu0
  %v1141 = vrot.slane %v1137, 6
  %v1143 = vadd.f32 %v981, %v1141
  %v1144 = vtanh.pop %v1143
  %v1146 = vrot.slane %v1144, 2
  %v1147 = vsel %vm991, %v1146, 0
  %1149 = vmatprep.subr.mxu0 0.0
  %1150 = vmatpush1.msra.mxu0 %v989
  %1151 = vmatprep.subr.mxu0 0.0
  %1152 = vmatpush1.msra.mxu0 %v990
  %1153 = vmatprep.subr.mxu0 0.0
  %1154 = vmatpush1.msra.mxu0 0.0
  %1155 = vmatprep.subr.mxu0 0.0
  %1156 = vmatpush1.msra.mxu0 0.0
  %1157 = vmatprep.subr.mxu0 0.0
  %1158 = vmatpush1.msra.mxu0 0.0
  %1159 = vmatprep.subr.mxu0 0.0
  %1160 = vmatpush1.msra.mxu0 0.0
  %1161 = vmatprep.subr.mxu0 0.0
  %1162 = vmatpush1.msra.mxu0 0.0
  %1163 = vmatprep.subr.mxu0 0.0
  %1164 = vmatpush1.msra.mxu0 0.0
  %1165 = vmatprep.subr.mxu0 0.0
  %1166 = vmatpush1.msra.mxu0 0.0
  %1167 = vmatprep.subr.mxu0 0.0
  %1168 = vmatpush1.msra.mxu0 0.0
  %1169 = vmatprep.subr.mxu0 0.0
  %1170 = vmatpush1.msra.mxu0 0.0
  %1171 = vmatprep.subr.mxu0 0.0
  %1172 = vmatpush1.msra.mxu0 0.0
  %1173 = vmatprep.subr.mxu0 0.0
  %1174 = vmatpush1.msra.mxu0 0.0
  %1175 = vmatprep.subr.mxu0 0.0
  %1176 = vmatpush1.msra.mxu0 0.0
  %1177 = vmatprep.subr.mxu0 0.0
  %1178 = vmatpush1.msra.mxu0 0.0
  %1179 = vmatprep.subr.mxu0 0.0
  %1180 = vmatpush1.msra.mxu0 0.0
  %1181 = vmatprep.subr.mxu0 0.0
  %1182 = vmatpush1.msra.mxu0 0.0
  %1183 = vmatprep.subr.mxu0 0.0
  %1184 = vmatpush1.msra.mxu0 0.0
  %1185 = vmatprep.subr.mxu0 0.0
  %1186 = vmatpush1.msra.mxu0 0.0
  %1187 = vmatprep.subr.mxu0 0.0
  %1188 = vmatpush1.msra.mxu0 0.0
  %1189 = vmatprep.subr.mxu0 0.0
  %1190 = vmatpush1.msra.mxu0 0.0
  %1191 = vmatprep.subr.mxu0 0.0
  %1192 = vmatpush1.msra.mxu0 0.0
  %1193 = vmatprep.subr.mxu0 0.0
  %1194 = vmatpush1.msra.mxu0 0.0
  %1195 = vmatprep.subr.mxu0 0.0
  %1196 = vmatpush1.msra.mxu0 0.0
  %1197 = vmatprep.subr.mxu0 0.0
  %1198 = vmatpush1.msra.mxu0 0.0
  %1199 = vmatprep.subr.mxu0 0.0
  %1200 = vmatpush1.msra.mxu0 0.0
  %1201 = vmatprep.subr.mxu0 0.0
  %1202 = vmatpush1.msra.mxu0 0.0
  %1203 = vmatprep.subr.mxu0 0.0
  %1204 = vmatpush1.msra.mxu0 0.0
  %1205 = vmatprep.subr.mxu0 0.0
  %1206 = vmatpush1.msra.mxu0 0.0
  %1207 = vmatprep.subr.mxu0 0.0
  %1208 = vmatpush1.msra.mxu0 0.0
  %1209 = vmatprep.subr.mxu0 0.0
  %1210 = vmatpush1.msra.mxu0 0.0
  %1211 = vmatprep.subr.mxu0 0.0
  %1212 = vmatpush1.msra.mxu0 0.0
  %1213 = vmatprep.mubr.f32.mxu0 0.0
  %1214 = vmatmul.mubr.f32.gmra.mrb[0].mxu0 %v1147
  %v1215 = vpop.f32.mrb[0].mxu0
  %v1216 = vadd.f32 0.0, %v1215
  %v1217 = vpop.f32.mrb[0].mxu0
  %1218 = vdwg.mxu0
  %v1220 = vrot.slane %v1216, 4
  %v1222 = vadd.f32 %v981, %v1220
  %v1223 = vtanh.pop %v1222
  %v1225 = vrot.slane %v1223, 4
  %v1226 = vsel %vm991, %v1225, 0
  %1228 = vmatprep.subr.mxu0 0.0
  %1229 = vmatpush1.msra.mxu0 %v989
  %1230 = vmatprep.subr.mxu0 0.0
  %1231 = vmatpush1.msra.mxu0 %v990
  %1232 = vmatprep.subr.mxu0 0.0
  %1233 = vmatpush1.msra.mxu0 0.0
  %1234 = vmatprep.subr.mxu0 0.0
  %1235 = vmatpush1.msra.mxu0 0.0
  %1236 = vmatprep.subr.mxu0 0.0
  %1237 = vmatpush1.msra.mxu0 0.0
  %1238 = vmatprep.subr.mxu0 0.0
  %1239 = vmatpush1.msra.mxu0 0.0
  %1240 = vmatprep.subr.mxu0 0.0
  %1241 = vmatpush1.msra.mxu0 0.0
  %1242 = vmatprep.subr.mxu0 0.0
  %1243 = vmatpush1.msra.mxu0 0.0
  %1244 = vmatprep.subr.mxu0 0.0
  %1245 = vmatpush1.msra.mxu0 0.0
  %1246 = vmatprep.subr.mxu0 0.0
  %1247 = vmatpush1.msra.mxu0 0.0
  %1248 = vmatprep.subr.mxu0 0.0
  %1249 = vmatpush1.msra.mxu0 0.0
  %1250 = vmatprep.subr.mxu0 0.0
  %1251 = vmatpush1.msra.mxu0 0.0
  %1252 = vmatprep.subr.mxu0 0.0
  %1253 = vmatpush1.msra.mxu0 0.0
  %1254 = vmatprep.subr.mxu0 0.0
  %1255 = vmatpush1.msra.mxu0 0.0
  %1256 = vmatprep.subr.mxu0 0.0
  %1257 = vmatpush1.msra.mxu0 0.0
  %1258 = vmatprep.subr.mxu0 0.0
  %1259 = vmatpush1.msra.mxu0 0.0
  %1260 = vmatprep.subr.mxu0 0.0
  %1261 = vmatpush1.msra.mxu0 0.0
  %1262 = vmatprep.subr.mxu0 0.0
  %1263 = vmatpush1.msra.mxu0 0.0
  %1264 = vmatprep.subr.mxu0 0.0
  %1265 = vmatpush1.msra.mxu0 0.0
  %1266 = vmatprep.subr.mxu0 0.0
  %1267 = vmatpush1.msra.mxu0 0.0
  %1268 = vmatprep.subr.mxu0 0.0
  %1269 = vmatpush1.msra.mxu0 0.0
  %1270 = vmatprep.subr.mxu0 0.0
  %1271 = vmatpush1.msra.mxu0 0.0
  %1272 = vmatprep.subr.mxu0 0.0
  %1273 = vmatpush1.msra.mxu0 0.0
  %1274 = vmatprep.subr.mxu0 0.0
  %1275 = vmatpush1.msra.mxu0 0.0
  %1276 = vmatprep.subr.mxu0 0.0
  %1277 = vmatpush1.msra.mxu0 0.0
  %1278 = vmatprep.subr.mxu0 0.0
  %1279 = vmatpush1.msra.mxu0 0.0
  %1280 = vmatprep.subr.mxu0 0.0
  %1281 = vmatpush1.msra.mxu0 0.0
  %1282 = vmatprep.subr.mxu0 0.0
  %1283 = vmatpush1.msra.mxu0 0.0
  %1284 = vmatprep.subr.mxu0 0.0
  %1285 = vmatpush1.msra.mxu0 0.0
  %1286 = vmatprep.subr.mxu0 0.0
  %1287 = vmatpush1.msra.mxu0 0.0
  %1288 = vmatprep.subr.mxu0 0.0
  %1289 = vmatpush1.msra.mxu0 0.0
  %1290 = vmatprep.subr.mxu0 0.0
  %1291 = vmatpush1.msra.mxu0 0.0
  %1292 = vmatprep.mubr.f32.mxu0 0.0
  %1293 = vmatmul.mubr.f32.gmra.mrb[0].mxu0 %v1226
  %v1294 = vpop.f32.mrb[0].mxu0
  %v1295 = vadd.f32 0.0, %v1294
  %v1296 = vpop.f32.mrb[0].mxu0
  %1297 = vdwg.mxu0
  %v1299 = vrot.slane %v1295, 2
  %v1301 = vadd.f32 %v981, %v1299
  %v1302 = vtanh.pop %v1301
  %v1304 = vrot.slane %v1302, 6
  %v1305 = vsel %vm991, %v1304, 0
  %1307 = vmatprep.subr.mxu0 0.0
  %1308 = vmatpush1.msra.mxu0 %v989
  %1309 = vmatprep.subr.mxu0 0.0
  %1310 = vmatpush1.msra.mxu0 %v990
  %1311 = vmatprep.subr.mxu0 0.0
  %1312 = vmatpush1.msra.mxu0 0.0
  %1313 = vmatprep.subr.mxu0 0.0
  %1314 = vmatpush1.msra.mxu0 0.0
  %1315 = vmatprep.subr.mxu0 0.0
  %1316 = vmatpush1.msra.mxu0 0.0
  %1317 = vmatprep.subr.mxu0 0.0
  %1318 = vmatpush1.msra.mxu0 0.0
  %1319 = vmatprep.subr.mxu0 0.0
  %1320 = vmatpush1.msra.mxu0 0.0
  %1321 = vmatprep.subr.mxu0 0.0
  %1322 = vmatpush1.msra.mxu0 0.0
  %1323 = vmatprep.subr.mxu0 0.0
  %1324 = vmatpush1.msra.mxu0 0.0
  %1325 = vmatprep.subr.mxu0 0.0
  %1326 = vmatpush1.msra.mxu0 0.0
  %1327 = vmatprep.subr.mxu0 0.0
  %1328 = vmatpush1.msra.mxu0 0.0
  %1329 = vmatprep.subr.mxu0 0.0
  %1330 = vmatpush1.msra.mxu0 0.0
  %1331 = vmatprep.subr.mxu0 0.0
  %1332 = vmatpush1.msra.mxu0 0.0
  %1333 = vmatprep.subr.mxu0 0.0
  %1334 = vmatpush1.msra.mxu0 0.0
  %1335 = vmatprep.subr.mxu0 0.0
  %1336 = vmatpush1.msra.mxu0 0.0
  %1337 = vmatprep.subr.mxu0 0.0
  %1338 = vmatpush1.msra.mxu0 0.0
  %1339 = vmatprep.subr.mxu0 0.0
  %1340 = vmatpush1.msra.mxu0 0.0
  %1341 = vmatprep.subr.mxu0 0.0
  %1342 = vmatpush1.msra.mxu0 0.0
  %1343 = vmatprep.subr.mxu0 0.0
  %1344 = vmatpush1.msra.mxu0 0.0
  %1345 = vmatprep.subr.mxu0 0.0
  %1346 = vmatpush1.msra.mxu0 0.0
  %1347 = vmatprep.subr.mxu0 0.0
  %1348 = vmatpush1.msra.mxu0 0.0
  %1349 = vmatprep.subr.mxu0 0.0
  %1350 = vmatpush1.msra.mxu0 0.0
  %1351 = vmatprep.subr.mxu0 0.0
  %1352 = vmatpush1.msra.mxu0 0.0
  %1353 = vmatprep.subr.mxu0 0.0
  %1354 = vmatpush1.msra.mxu0 0.0
  %1355 = vmatprep.subr.mxu0 0.0
  %1356 = vmatpush1.msra.mxu0 0.0
  %1357 = vmatprep.subr.mxu0 0.0
  %1358 = vmatpush1.msra.mxu0 0.0
  %1359 = vmatprep.subr.mxu0 0.0
  %1360 = vmatpush1.msra.mxu0 0.0
  %1361 = vmatprep.subr.mxu0 0.0
  %1362 = vmatpush1.msra.mxu0 0.0
  %1363 = vmatprep.subr.mxu0 0.0
  %1364 = vmatpush1.msra.mxu0 0.0
  %1365 = vmatprep.subr.mxu0 0.0
  %1366 = vmatpush1.msra.mxu0 0.0
  %1367 = vmatprep.subr.mxu0 0.0
  %1368 = vmatpush1.msra.mxu0 0.0
  %1369 = vmatprep.subr.mxu0 0.0
  %1370 = vmatpush1.msra.mxu0 0.0
  %1371 = vmatprep.mubr.f32.mxu0 0.0
  %1372 = vmatmul.mubr.f32.gmra.mrb[0].mxu0 %v1305
  %v1373 = vpop.f32.mrb[0].mxu0
  %v1374 = vadd.f32 0.0, %v1373
  %v1375 = vpop.f32.mrb[0].mxu0
  %1376 = vdwg.mxu0
  %v1377 = vadd.f32 %v986, %v1374
  %v1378 = vtanh.pop %v1377
  %v1380 = vsel %vm991, %v1378, 0
  %1382 = vmatprep.subr.mxu0 0.0
  %1383 = vmatpush1.msra.mxu0 %v989
  %1384 = vmatprep.subr.mxu0 0.0
  %1385 = vmatpush1.msra.mxu0 %v990
  %1386 = vmatprep.subr.mxu0 0.0
  %1387 = vmatpush1.msra.mxu0 0.0
  %1388 = vmatprep.subr.mxu0 0.0
  %1389 = vmatpush1.msra.mxu0 0.0
  %1390 = vmatprep.subr.mxu0 0.0
  %1391 = vmatpush1.msra.mxu0 0.0
  %1392 = vmatprep.subr.mxu0 0.0
  %1393 = vmatpush1.msra.mxu0 0.0
  %1394 = vmatprep.subr.mxu0 0.0
  %1395 = vmatpush1.msra.mxu0 0.0
  %1396 = vmatprep.subr.mxu0 0.0
  %1397 = vmatpush1.msra.mxu0 0.0
  %1398 = vmatprep.subr.mxu0 0.0
  %1399 = vmatpush1.msra.mxu0 0.0
  %1400 = vmatprep.subr.mxu0 0.0
  %1401 = vmatpush1.msra.mxu0 0.0
  %1402 = vmatprep.subr.mxu0 0.0
  %1403 = vmatpush1.msra.mxu0 0.0
  %1404 = vmatprep.subr.mxu0 0.0
  %1405 = vmatpush1.msra.mxu0 0.0
  %1406 = vmatprep.subr.mxu0 0.0
  %1407 = vmatpush1.msra.mxu0 0.0
  %1408 = vmatprep.subr.mxu0 0.0
  %1409 = vmatpush1.msra.mxu0 0.0
  %1410 = vmatprep.subr.mxu0 0.0
  %1411 = vmatpush1.msra.mxu0 0.0
  %1412 = vmatprep.subr.mxu0 0.0
  %1413 = vmatpush1.msra.mxu0 0.0
  %1414 = vmatprep.subr.mxu0 0.0
  %1415 = vmatpush1.msra.mxu0 0.0
  %1416 = vmatprep.subr.mxu0 0.0
  %1417 = vmatpush1.msra.mxu0 0.0
  %1418 = vmatprep.subr.mxu0 0.0
  %1419 = vmatpush1.msra.mxu0 0.0
  %1420 = vmatprep.subr.mxu0 0.0
  %1421 = vmatpush1.msra.mxu0 0.0
  %1422 = vmatprep.subr.mxu0 0.0
  %1423 = vmatpush1.msra.mxu0 0.0
  %1424 = vmatprep.subr.mxu0 0.0
  %1425 = vmatpush1.msra.mxu0 0.0
  %1426 = vmatprep.subr.mxu0 0.0
  %1427 = vmatpush1.msra.mxu0 0.0
  %1428 = vmatprep.subr.mxu0 0.0
  %1429 = vmatpush1.msra.mxu0 0.0
  %1430 = vmatprep.subr.mxu0 0.0
  %1431 = vmatpush1.msra.mxu0 0.0
  %1432 = vmatprep.subr.mxu0 0.0
  %1433 = vmatpush1.msra.mxu0 0.0
  %1434 = vmatprep.subr.mxu0 0.0
  %1435 = vmatpush1.msra.mxu0 0.0
  %1436 = vmatprep.subr.mxu0 0.0
  %1437 = vmatpush1.msra.mxu0 0.0
  %1438 = vmatprep.subr.mxu0 0.0
  %1439 = vmatpush1.msra.mxu0 0.0
  %1440 = vmatprep.subr.mxu0 0.0
  %1441 = vmatpush1.msra.mxu0 0.0
  %1442 = vmatprep.subr.mxu0 0.0
  %1443 = vmatpush1.msra.mxu0 0.0
  %1444 = vmatprep.subr.mxu0 0.0
  %1445 = vmatpush1.msra.mxu0 0.0
  %1446 = vmatprep.mubr.f32.mxu0 0.0
  %1447 = vmatmul.mubr.f32.gmra.mrb[0].mxu0 %v1380
  %v1448 = vpop.f32.mrb[0].mxu0
  %v1449 = vadd.f32 0.0, %v1448
  %v1450 = vpop.f32.mrb[0].mxu0
  %1451 = vdwg.mxu0
  %v1453 = vrot.slane %v1449, 6
  %v1455 = vadd.f32 %v986, %v1453
  %v1456 = vtanh.pop %v1455
  %v1458 = vrot.slane %v1456, 2
  %v1459 = vsel %vm991, %v1458, 0
  %1461 = vmatprep.subr.mxu0 0.0
  %1462 = vmatpush1.msra.mxu0 %v989
  %1463 = vmatprep.subr.mxu0 0.0
  %1464 = vmatpush1.msra.mxu0 %v990
  %1465 = vmatprep.subr.mxu0 0.0
  %1466 = vmatpush1.msra.mxu0 0.0
  %1467 = vmatprep.subr.mxu0 0.0
  %1468 = vmatpush1.msra.mxu0 0.0
  %1469 = vmatprep.subr.mxu0 0.0
  %1470 = vmatpush1.msra.mxu0 0.0
  %1471 = vmatprep.subr.mxu0 0.0
  %1472 = vmatpush1.msra.mxu0 0.0
  %1473 = vmatprep.subr.mxu0 0.0
  %1474 = vmatpush1.msra.mxu0 0.0
  %1475 = vmatprep.subr.mxu0 0.0
  %1476 = vmatpush1.msra.mxu0 0.0
  %1477 = vmatprep.subr.mxu0 0.0
  %1478 = vmatpush1.msra.mxu0 0.0
  %1479 = vmatprep.subr.mxu0 0.0
  %1480 = vmatpush1.msra.mxu0 0.0
  %1481 = vmatprep.subr.mxu0 0.0
  %1482 = vmatpush1.msra.mxu0 0.0
  %1483 = vmatprep.subr.mxu0 0.0
  %1484 = vmatpush1.msra.mxu0 0.0
  %1485 = vmatprep.subr.mxu0 0.0
  %1486 = vmatpush1.msra.mxu0 0.0
  %1487 = vmatprep.subr.mxu0 0.0
  %1488 = vmatpush1.msra.mxu0 0.0
  %1489 = vmatprep.subr.mxu0 0.0
  %1490 = vmatpush1.msra.mxu0 0.0
  %1491 = vmatprep.subr.mxu0 0.0
  %1492 = vmatpush1.msra.mxu0 0.0
  %1493 = vmatprep.subr.mxu0 0.0
  %1494 = vmatpush1.msra.mxu0 0.0
  %1495 = vmatprep.subr.mxu0 0.0
  %1496 = vmatpush1.msra.mxu0 0.0
  %1497 = vmatprep.subr.mxu0 0.0
  %1498 = vmatpush1.msra.mxu0 0.0
  %1499 = vmatprep.subr.mxu0 0.0
  %1500 = vmatpush1.msra.mxu0 0.0
  %1501 = vmatprep.subr.mxu0 0.0
  %1502 = vmatpush1.msra.mxu0 0.0
  %1503 = vmatprep.subr.mxu0 0.0
  %1504 = vmatpush1.msra.mxu0 0.0
  %1505 = vmatprep.subr.mxu0 0.0
  %1506 = vmatpush1.msra.mxu0 0.0
  %1507 = vmatprep.subr.mxu0 0.0
  %1508 = vmatpush1.msra.mxu0 0.0
  %1509 = vmatprep.subr.mxu0 0.0
  %1510 = vmatpush1.msra.mxu0 0.0
  %1511 = vmatprep.subr.mxu0 0.0
  %1512 = vmatpush1.msra.mxu0 0.0
  %1513 = vmatprep.subr.mxu0 0.0
  %1514 = vmatpush1.msra.mxu0 0.0
  %1515 = vmatprep.subr.mxu0 0.0
  %1516 = vmatpush1.msra.mxu0 0.0
  %1517 = vmatprep.subr.mxu0 0.0
  %1518 = vmatpush1.msra.mxu0 0.0
  %1519 = vmatprep.subr.mxu0 0.0
  %1520 = vmatpush1.msra.mxu0 0.0
  %1521 = vmatprep.subr.mxu0 0.0
  %1522 = vmatpush1.msra.mxu0 0.0
  %1523 = vmatprep.subr.mxu0 0.0
  %1524 = vmatpush1.msra.mxu0 0.0
  %1525 = vmatprep.mubr.f32.mxu0 0.0
  %1526 = vmatmul.mubr.f32.gmra.mrb[0].mxu0 %v1459
  %v1527 = vpop.f32.mrb[0].mxu0
  %v1528 = vadd.f32 0.0, %v1527
  %v1529 = vpop.f32.mrb[0].mxu0
  %1530 = vdwg.mxu0
  %v1532 = vrot.slane %v1528, 4
  %v1534 = vadd.f32 %v986, %v1532
  %v1535 = vtanh.pop %v1534
  %v1537 = vrot.slane %v1535, 4
  %v1538 = vsel %vm991, %v1537, 0
  %1540 = vmatprep.subr.mxu0 0.0
  %1541 = vmatpush1.msra.mxu0 %v989
  %1542 = vmatprep.subr.mxu0 0.0
  %1543 = vmatpush1.msra.mxu0 %v990
  %1544 = vmatprep.subr.mxu0 0.0
  %1545 = vmatpush1.msra.mxu0 0.0
  %1546 = vmatprep.subr.mxu0 0.0
  %1547 = vmatpush1.msra.mxu0 0.0
  %1548 = vmatprep.subr.mxu0 0.0
  %1549 = vmatpush1.msra.mxu0 0.0
  %1550 = vmatprep.subr.mxu0 0.0
  %1551 = vmatpush1.msra.mxu0 0.0
  %1552 = vmatprep.subr.mxu0 0.0
  %1553 = vmatpush1.msra.mxu0 0.0
  %1554 = vmatprep.subr.mxu0 0.0
  %1555 = vmatpush1.msra.mxu0 0.0
  %1556 = vmatprep.subr.mxu0 0.0
  %1557 = vmatpush1.msra.mxu0 0.0
  %1558 = vmatprep.subr.mxu0 0.0
  %1559 = vmatpush1.msra.mxu0 0.0
  %1560 = vmatprep.subr.mxu0 0.0
  %1561 = vmatpush1.msra.mxu0 0.0
  %1562 = vmatprep.subr.mxu0 0.0
  %1563 = vmatpush1.msra.mxu0 0.0
  %1564 = vmatprep.subr.mxu0 0.0
  %1565 = vmatpush1.msra.mxu0 0.0
  %1566 = vmatprep.subr.mxu0 0.0
  %1567 = vmatpush1.msra.mxu0 0.0
  %1568 = vmatprep.subr.mxu0 0.0
  %1569 = vmatpush1.msra.mxu0 0.0
  %1570 = vmatprep.subr.mxu0 0.0
  %1571 = vmatpush1.msra.mxu0 0.0
  %1572 = vmatprep.subr.mxu0 0.0
  %1573 = vmatpush1.msra.mxu0 0.0
  %1574 = vmatprep.subr.mxu0 0.0
  %1575 = vmatpush1.msra.mxu0 0.0
  %1576 = vmatprep.subr.mxu0 0.0
  %1577 = vmatpush1.msra.mxu0 0.0
  %1578 = vmatprep.subr.mxu0 0.0
  %1579 = vmatpush1.msra.mxu0 0.0
  %1580 = vmatprep.subr.mxu0 0.0
  %1581 = vmatpush1.msra.mxu0 0.0
  %1582 = vmatprep.subr.mxu0 0.0
  %1583 = vmatpush1.msra.mxu0 0.0
  %1584 = vmatprep.subr.mxu0 0.0
  %1585 = vmatpush1.msra.mxu0 0.0
  %1586 = vmatprep.subr.mxu0 0.0
  %1587 = vmatpush1.msra.mxu0 0.0
  %1588 = vmatprep.subr.mxu0 0.0
  %1589 = vmatpush1.msra.mxu0 0.0
  %1590 = vmatprep.subr.mxu0 0.0
  %1591 = vmatpush1.msra.mxu0 0.0
  %1592 = vmatprep.subr.mxu0 0.0
  %1593 = vmatpush1.msra.mxu0 0.0
  %1594 = vmatprep.subr.mxu0 0.0
  %1595 = vmatpush1.msra.mxu0 0.0
  %1596 = vmatprep.subr.mxu0 0.0
  %1597 = vmatpush1.msra.mxu0 0.0
  %1598 = vmatprep.subr.mxu0 0.0
  %1599 = vmatpush1.msra.mxu0 0.0
  %1600 = vmatprep.subr.mxu0 0.0
  %1601 = vmatpush1.msra.mxu0 0.0
  %1602 = vmatprep.subr.mxu0 0.0
  %1603 = vmatpush1.msra.mxu0 0.0
  %1604 = vmatprep.mubr.f32.mxu0 0.0
  %1605 = vmatmul.mubr.f32.gmra.mrb[0].mxu0 %v1538
  %v1606 = vpop.f32.mrb[0].mxu0
  %v1607 = vadd.f32 0.0, %v1606
  %v1608 = vpop.f32.mrb[0].mxu0
  %1609 = vdwg.mxu0
  %v1611 = vrot.slane %v1607, 2
  %v1613 = vadd.f32 %v986, %v1611
  %v1614 = vtanh.pop %v1613
  %v1615 = vld [vmem:[%s2] sm:$0x3]
  %v1616 = vld [vmem:[%s6] sm:$0xff]
  %v1617 = vld [vmem:[%s6 + $0x8] sm:$0xff]
  %1618 = vrot.lane.b32.xlu0 %v112, 104
  %v1619 = vpop.permute.xlu0 %1618
  %v1622 = vsel %vm991, %v1615, 0
  %1624 = vmatprep.subr.mxu0 0.0
  %1625 = vmatpush1.msra.mxu0 %v1616
  %1626 = vmatprep.subr.mxu0 0.0
  %1627 = vmatpush1.msra.mxu0 %v1617
  %1628 = vmatprep.subr.mxu0 0.0
  %1629 = vmatpush1.msra.mxu0 0.0
  %1630 = vmatprep.subr.mxu0 0.0
  %1631 = vmatpush1.msra.mxu0 0.0
  %1632 = vmatprep.subr.mxu0 0.0
  %1633 = vmatpush1.msra.mxu0 0.0
  %1634 = vmatprep.subr.mxu0 0.0
  %1635 = vmatpush1.msra.mxu0 0.0
  %1636 = vmatprep.subr.mxu0 0.0
  %1637 = vmatpush1.msra.mxu0 0.0
  %1638 = vmatprep.subr.mxu0 0.0
  %1639 = vmatpush1.msra.mxu0 0.0
  %1640 = vmatprep.subr.mxu0 0.0
  %1641 = vmatpush1.msra.mxu0 0.0
  %1642 = vmatprep.subr.mxu0 0.0
  %1643 = vmatpush1.msra.mxu0 0.0
  %1644 = vmatprep.subr.mxu0 0.0
  %1645 = vmatpush1.msra.mxu0 0.0
  %1646 = vmatprep.subr.mxu0 0.0
  %1647 = vmatpush1.msra.mxu0 0.0
  %1648 = vmatprep.subr.mxu0 0.0
  %1649 = vmatpush1.msra.mxu0 0.0
  %1650 = vmatprep.subr.mxu0 0.0
  %1651 = vmatpush1.msra.mxu0 0.0
  %1652 = vmatprep.subr.mxu0 0.0
  %1653 = vmatpush1.msra.mxu0 0.0
  %1654 = vmatprep.subr.mxu0 0.0
  %1655 = vmatpush1.msra.mxu0 0.0
  %1656 = vmatprep.subr.mxu0 0.0
  %1657 = vmatpush1.msra.mxu0 0.0
  %1658 = vmatprep.subr.mxu0 0.0
  %1659 = vmatpush1.msra.mxu0 0.0
  %1660 = vmatprep.subr.mxu0 0.0
  %1661 = vmatpush1.msra.mxu0 0.0
  %1662 = vmatprep.subr.mxu0 0.0
  %1663 = vmatpush1.msra.mxu0 0.0
  %1664 = vmatprep.subr.mxu0 0.0
  %1665 = vmatpush1.msra.mxu0 0.0
  %1666 = vmatprep.subr.mxu0 0.0
  %1667 = vmatpush1.msra.mxu0 0.0
  %1668 = vmatprep.subr.mxu0 0.0
  %1669 = vmatpush1.msra.mxu0 0.0
  %1670 = vmatprep.subr.mxu0 0.0
  %1671 = vmatpush1.msra.mxu0 0.0
  %1672 = vmatprep.subr.mxu0 0.0
  %1673 = vmatpush1.msra.mxu0 0.0
  %1674 = vmatprep.subr.mxu0 0.0
  %1675 = vmatpush1.msra.mxu0 0.0
  %1676 = vmatprep.subr.mxu0 0.0
  %1677 = vmatpush1.msra.mxu0 0.0
  %1678 = vmatprep.subr.mxu0 0.0
  %1679 = vmatpush1.msra.mxu0 0.0
  %1680 = vmatprep.subr.mxu0 0.0
  %1681 = vmatpush1.msra.mxu0 0.0
  %1682 = vmatprep.subr.mxu0 0.0
  %1683 = vmatpush1.msra.mxu0 0.0
  %1684 = vmatprep.subr.mxu0 0.0
  %1685 = vmatpush1.msra.mxu0 0.0
  %1686 = vmatprep.subr.mxu0 0.0
  %1687 = vmatpush1.msra.mxu0 0.0
  %1688 = vmatprep.mubr.f32.mxu0 0.0
  %1689 = vmatmul.mubr.f32.gmra.mrb[0].mxu0 %v1622
  %v1690 = vpop.f32.mrb[0].mxu0
  %v1691 = vadd.f32 %v1619, %v1690
  %v1692 = vpop.f32.mrb[0].mxu0
  %1693 = vdwg.mxu0
  %v1694 = vmax.f32 %v1691, 0.0
  %vm1697 = vcmask 1041409
  %v1698 = vsel %vm1697, %v901, %v900
  %v1701 = vrot.slane %v1614, 6
  %1702 = vrot.lane.b32.xlu0 %v1701, 8
  %v1703 = vpop.permute.xlu0 %1702
  %1706 = vrot.lane.b32.xlu0 %v1694, 24
  %v1707 = vpop.permute.xlu0 %1706
  %v1709 = vsel %vm760, %v1698, %v1703
  %vm1710 = vcmask 195584
  %v1711 = vsel %vm1710, %v1709, %v1707
  %v1712 = vld [vmem:[%s7] sm:$0xff]
  %v1713 = vld [vmem:[%s7 + $0x8] sm:$0xff]
  %v1714 = vld [vmem:[%s7 + $0x10] sm:$0xff]
  %v1715 = vld [vmem:[%s7 + $0x18] sm:$0xff]
  %v1716 = vld [vmem:[%s7 + $0x20] sm:$0xff]
  %v1717 = vld [vmem:[%s7 + $0x28] sm:$0xff]
  %v1718 = vld [vmem:[%s7 + $0x30] sm:$0xff]
  %1719 = vrot.lane.b32.xlu0 %v112, 72
  %v1720 = vpop.permute.xlu0 %1719
  %vm1722 = vcmask 457728
  %v1724 = vsel %vm1722, %v1711, 0
  %1726 = vmatprep.subr.mxu0 0.0
  %1727 = vmatpush1.msra.mxu0 %v1712
  %1728 = vmatprep.subr.mxu0 0.0
  %1729 = vmatpush1.msra.mxu0 %v1713
  %1730 = vmatprep.subr.mxu0 0.0
  %1731 = vmatpush1.msra.mxu0 %v1714
  %1732 = vmatprep.subr.mxu0 0.0
  %1733 = vmatpush1.msra.mxu0 %v1715
  %1734 = vmatprep.subr.mxu0 0.0
  %1735 = vmatpush1.msra.mxu0 %v1716
  %1736 = vmatprep.subr.mxu0 0.0
  %1737 = vmatpush1.msra.mxu0 %v1717
  %1738 = vmatprep.subr.mxu0 0.0
  %1739 = vmatpush1.msra.mxu0 %v1718
  %1740 = vmatprep.subr.mxu0 0.0
  %1741 = vmatpush1.msra.mxu0 0.0
  %1742 = vmatprep.subr.mxu0 0.0
  %1743 = vmatpush1.msra.mxu0 0.0
  %1744 = vmatprep.subr.mxu0 0.0
  %1745 = vmatpush1.msra.mxu0 0.0
  %1746 = vmatprep.subr.mxu0 0.0
  %1747 = vmatpush1.msra.mxu0 0.0
  %1748 = vmatprep.subr.mxu0 0.0
  %1749 = vmatpush1.msra.mxu0 0.0
  %1750 = vmatprep.subr.mxu0 0.0
  %1751 = vmatpush1.msra.mxu0 0.0
  %1752 = vmatprep.subr.mxu0 0.0
  %1753 = vmatpush1.msra.mxu0 0.0
  %1754 = vmatprep.subr.mxu0 0.0
  %1755 = vmatpush1.msra.mxu0 0.0
  %1756 = vmatprep.subr.mxu0 0.0
  %1757 = vmatpush1.msra.mxu0 0.0
  %1758 = vmatprep.subr.mxu0 0.0
  %1759 = vmatpush1.msra.mxu0 0.0
  %1760 = vmatprep.subr.mxu0 0.0
  %1761 = vmatpush1.msra.mxu0 0.0
  %1762 = vmatprep.subr.mxu0 0.0
  %1763 = vmatpush1.msra.mxu0 0.0
  %1764 = vmatprep.subr.mxu0 0.0
  %1765 = vmatpush1.msra.mxu0 0.0
  %1766 = vmatprep.subr.mxu0 0.0
  %1767 = vmatpush1.msra.mxu0 0.0
  %1768 = vmatprep.subr.mxu0 0.0
  %1769 = vmatpush1.msra.mxu0 0.0
  %1770 = vmatprep.subr.mxu0 0.0
  %1771 = vmatpush1.msra.mxu0 0.0
  %1772 = vmatprep.subr.mxu0 0.0
  %1773 = vmatpush1.msra.mxu0 0.0
  %1774 = vmatprep.subr.mxu0 0.0
  %1775 = vmatpush1.msra.mxu0 0.0
  %1776 = vmatprep.subr.mxu0 0.0
  %1777 = vmatpush1.msra.mxu0 0.0
  %1778 = vmatprep.subr.mxu0 0.0
  %1779 = vmatpush1.msra.mxu0 0.0
  %1780 = vmatprep.subr.mxu0 0.0
  %1781 = vmatpush1.msra.mxu0 0.0
  %1782 = vmatprep.subr.mxu0 0.0
  %1783 = vmatpush1.msra.mxu0 0.0
  %1784 = vmatprep.subr.mxu0 0.0
  %1785 = vmatpush1.msra.mxu0 0.0
  %1786 = vmatprep.subr.mxu0 0.0
  %1787 = vmatpush1.msra.mxu0 0.0
  %1788 = vmatprep.subr.mxu0 0.0
  %1789 = vmatpush1.msra.mxu0 0.0
  %1790 = vmatprep.mubr.f32.mxu0 0.0
  %1791 = vmatmul.mubr.f32.gmra.mrb[0].mxu0 %v1724
  %v1792 = vpop.f32.mrb[0].mxu0
  %v1793 = vadd.f32 %v1720, %v1792
  %v1794 = vpop.f32.mrb[0].mxu0
  %1795 = vdwg.mxu0
  %v1796 = vmul.f32 %v1793, 0.5
  %v1797 = vtanh.pop %v1796
  %v1798 = vadd.f32 %v1797, 1.0
  %v1799 = vmul.f32 %v1798, 0.5
  %v1800 = vld [vmem:[%s8] sm:$0x7]
  %1801 = vrot.lane.b32.xlu0 %v112, 69
  %v1802 = vpop.permute.xlu0 %1801
  %vm1804 = vcmask 23552
  %v1806 = vsel %vm1804, %v1799, 0
  %vm1808 = vcmask 1042432
  %v1810 = vsel %vm1808, %v1800, 0
  %1812 = vmatprep.subr.mxu0 0.0
  %1813 = vmatpush1.msra.mxu0 %v1810
  %1814 = vmatprep.subr.mxu0 0.0
  %1815 = vmatpush1.msra.mxu0 0.0
  %1816 = vmatprep.subr.mxu0 0.0
  %1817 = vmatpush1.msra.mxu0 0.0
  %1818 = vmatprep.subr.mxu0 0.0
  %1819 = vmatpush1.msra.mxu0 0.0
  %1820 = vmatprep.subr.mxu0 0.0
  %1821 = vmatpush1.msra.mxu0 0.0
  %1822 = vmatprep.subr.mxu0 0.0
  %1823 = vmatpush1.msra.mxu0 0.0
  %1824 = vmatprep.subr.mxu0 0.0
  %1825 = vmatpush1.msra.mxu0 0.0
  %1826 = vmatprep.subr.mxu0 0.0
  %1827 = vmatpush1.msra.mxu0 0.0
  %1828 = vmatprep.subr.mxu0 0.0
  %1829 = vmatpush1.msra.mxu0 0.0
  %1830 = vmatprep.subr.mxu0 0.0
  %1831 = vmatpush1.msra.mxu0 0.0
  %1832 = vmatprep.subr.mxu0 0.0
  %1833 = vmatpush1.msra.mxu0 0.0
  %1834 = vmatprep.subr.mxu0 0.0
  %1835 = vmatpush1.msra.mxu0 0.0
  %1836 = vmatprep.subr.mxu0 0.0
  %1837 = vmatpush1.msra.mxu0 0.0
  %1838 = vmatprep.subr.mxu0 0.0
  %1839 = vmatpush1.msra.mxu0 0.0
  %1840 = vmatprep.subr.mxu0 0.0
  %1841 = vmatpush1.msra.mxu0 0.0
  %1842 = vmatprep.subr.mxu0 0.0
  %1843 = vmatpush1.msra.mxu0 0.0
  %1844 = vmatprep.subr.mxu0 0.0
  %1845 = vmatpush1.msra.mxu0 0.0
  %1846 = vmatprep.subr.mxu0 0.0
  %1847 = vmatpush1.msra.mxu0 0.0
  %1848 = vmatprep.subr.mxu0 0.0
  %1849 = vmatpush1.msra.mxu0 0.0
  %1850 = vmatprep.subr.mxu0 0.0
  %1851 = vmatpush1.msra.mxu0 0.0
  %1852 = vmatprep.subr.mxu0 0.0
  %1853 = vmatpush1.msra.mxu0 0.0
  %1854 = vmatprep.subr.mxu0 0.0
  %1855 = vmatpush1.msra.mxu0 0.0
  %1856 = vmatprep.subr.mxu0 0.0
  %1857 = vmatpush1.msra.mxu0 0.0
  %1858 = vmatprep.subr.mxu0 0.0
  %1859 = vmatpush1.msra.mxu0 0.0
  %1860 = vmatprep.subr.mxu0 0.0
  %1861 = vmatpush1.msra.mxu0 0.0
  %1862 = vmatprep.subr.mxu0 0.0
  %1863 = vmatpush1.msra.mxu0 0.0
  %1864 = vmatprep.subr.mxu0 0.0
  %1865 = vmatpush1.msra.mxu0 0.0
  %1866 = vmatprep.subr.mxu0 0.0
  %1867 = vmatpush1.msra.mxu0 0.0
  %1868 = vmatprep.subr.mxu0 0.0
  %1869 = vmatpush1.msra.mxu0 0.0
  %1870 = vmatprep.subr.mxu0 0.0
  %1871 = vmatpush1.msra.mxu0 0.0
  %1872 = vmatprep.subr.mxu0 0.0
  %1873 = vmatpush1.msra.mxu0 0.0
  %1874 = vmatprep.subr.mxu0 0.0
  %1875 = vmatpush1.msra.mxu0 0.0
  %1876 = vmatprep.mubr.f32.mxu0 0.0
  %1877 = vmatmul.mubr.f32.gmra.mrb[0].mxu0 %v1806
  %v1878 = vpop.f32.mrb[0].mxu0
  %v1879 = vadd.f32 %v1802, %v1878
  %v1880 = vpop.f32.mrb[0].mxu0
  %1881 = vdwg.mxu0
  %v1882 = vmax.f32 %v1879, 0.0
  %v1883 = vld [vmem:[%s9] sm:$0xff]
  %v1884 = vld [vmem:[%s9 + $0x8] sm:$0xff]
  %1885 = vrot.lane.b32.xlu0 %v112, 53
  %v1886 = vpop.permute.xlu0 %1885
  %v1889 = vsel %vm991, %v1882, 0
  %1891 = vmatprep.subr.mxu0 0.0
  %1892 = vmatpush1.msra.mxu0 %v1883
  %1893 = vmatprep.subr.mxu0 0.0
  %1894 = vmatpush1.msra.mxu0 %v1884
  %1895 = vmatprep.subr.mxu0 0.0
  %1896 = vmatpush1.msra.mxu0 0.0
  %1897 = vmatprep.subr.mxu0 0.0
  %1898 = vmatpush1.msra.mxu0 0.0
  %1899 = vmatprep.subr.mxu0 0.0
  %1900 = vmatpush1.msra.mxu0 0.0
  %1901 = vmatprep.subr.mxu0 0.0
  %1902 = vmatpush1.msra.mxu0 0.0
  %1903 = vmatprep.subr.mxu0 0.0
  %1904 = vmatpush1.msra.mxu0 0.0
  %1905 = vmatprep.subr.mxu0 0.0
  %1906 = vmatpush1.msra.mxu0 0.0
  %1907 = vmatprep.subr.mxu0 0.0
  %1908 = vmatpush1.msra.mxu0 0.0
  %1909 = vmatprep.subr.mxu0 0.0
  %1910 = vmatpush1.msra.mxu0 0.0
  %1911 = vmatprep.subr.mxu0 0.0
  %1912 = vmatpush1.msra.mxu0 0.0
  %1913 = vmatprep.subr.mxu0 0.0
  %1914 = vmatpush1.msra.mxu0 0.0
  %1915 = vmatprep.subr.mxu0 0.0
  %1916 = vmatpush1.msra.mxu0 0.0
  %1917 = vmatprep.subr.mxu0 0.0
  %1918 = vmatpush1.msra.mxu0 0.0
  %1919 = vmatprep.subr.mxu0 0.0
  %1920 = vmatpush1.msra.mxu0 0.0
  %1921 = vmatprep.subr.mxu0 0.0
  %1922 = vmatpush1.msra.mxu0 0.0
  %1923 = vmatprep.subr.mxu0 0.0
  %1924 = vmatpush1.msra.mxu0 0.0
  %1925 = vmatprep.subr.mxu0 0.0
  %1926 = vmatpush1.msra.mxu0 0.0
  %1927 = vmatprep.subr.mxu0 0.0
  %1928 = vmatpush1.msra.mxu0 0.0
  %1929 = vmatprep.subr.mxu0 0.0
  %1930 = vmatpush1.msra.mxu0 0.0
  %1931 = vmatprep.subr.mxu0 0.0
  %1932 = vmatpush1.msra.mxu0 0.0
  %1933 = vmatprep.subr.mxu0 0.0
  %1934 = vmatpush1.msra.mxu0 0.0
  %1935 = vmatprep.subr.mxu0 0.0
  %1936 = vmatpush1.msra.mxu0 0.0
  %1937 = vmatprep.subr.mxu0 0.0
  %1938 = vmatpush1.msra.mxu0 0.0
  %1939 = vmatprep.subr.mxu0 0.0
  %1940 = vmatpush1.msra.mxu0 0.0
  %1941 = vmatprep.subr.mxu0 0.0
  %1942 = vmatpush1.msra.mxu0 0.0
  %1943 = vmatprep.subr.mxu0 0.0
  %1944 = vmatpush1.msra.mxu0 0.0
  %1945 = vmatprep.subr.mxu0 0.0
  %1946 = vmatpush1.msra.mxu0 0.0
  %1947 = vmatprep.subr.mxu0 0.0
  %1948 = vmatpush1.msra.mxu0 0.0
  %1949 = vmatprep.subr.mxu0 0.0
  %1950 = vmatpush1.msra.mxu0 0.0
  %1951 = vmatprep.subr.mxu0 0.0
  %1952 = vmatpush1.msra.mxu0 0.0
  %1953 = vmatprep.subr.mxu0 0.0
  %1954 = vmatpush1.msra.mxu0 0.0
  %1955 = vmatprep.mubr.f32.mxu0 0.0
  %1956 = vmatmul.mubr.f32.gmra.mrb[0].mxu0 %v1889
  %v1957 = vpop.f32.mrb[0].mxu0
  %v1958 = vadd.f32 %v1886, %v1957
  %v1959 = vpop.f32.mrb[0].mxu0
  %1960 = vdwg.mxu0
  %vm1961 = vcmask 17408
  %v1962 = vsel %vm1961, %v1958, -inf
  %1963 = vmax.xlane.f32.xlu0 %v1962
  %v1964 = vpop.xlane.xlu0 %1963
  %v1965 = vsub.f32 %v1958, %v1964
  %v1966 = vmul.f32 %v1965, 1.442695
  %v1967 = vpow.pop %v1966
  %v1968 = vsel %vm1961, %v1967, 0.0
  %1969 = vadd.xlane.f32.xlu0 %v1968
  %v1970 = vpop.xlane.xlu0 %1969
  %v1971 = vrcp.pop %v1970
  %v1972 = vmul.f32 %v1967, %v1971
  %v1973 = vmul.f32 %v1972, %v1799
  %v1974 = vsel %vm1961, %v1973, 0.0
  %1975 = vadd.xlane.f32.xlu0 %v1974
  %v1976 = vpop.xlane.xlu0 %1975
  %1978 = vrot.lane.b32.xlu0 %v1972, 1
  %v1979 = vpop.permute.xlu0 %1978
  %1981 = vrot.lane.b32.xlu0 %v1799, 4
  %v1982 = vpop.permute.xlu0 %1981
  %vm1984 = vcmask 7168
  %v1985 = vsel %vm1984, %v1976, %v1979
  %vm1986 = vcmask 31744
  %v1987 = vsel %vm1986, %v1985, %v1982
  %vm1988 = vcmask 56320
  %v1989 = vsel %vm1988, %v1987, 0.0
  %1990 = vst [vmem:[%s11] sm:$0x3] %v1989
  // Predicated region
  $region46: #{moe_forward.1} parent=0 // pred_check
    _
  $region47: #{moe_forward.1} parent=0 // pred_check_branch
    %1992 = sbr.rel (0) target = $region49
  $region48: #{moe_forward.1} parent=0 // pred_region
    _
  $region49: #{moe_forward.1} parent=0 // pred_fallthru
    _
  // Predicated region
  $region50: #{moe_forward.1} parent=0 // pred_check
    _
  $region51: #{moe_forward.1} parent=0 // pred_check_branch
    %1994 = sbr.rel (0) target = $region53
  $region52: #{moe_forward.1} parent=0 // pred_region
    _
  $region53: #{moe_forward.1} parent=0 // pred_fallthru
    _

</llo_original>
